<compile_context>
chip_gen: v5e
topology: v5e:2x2
jax: 0.10.0
libtpu: 0.0.40
codegen_flags: <defaults>
</compile_context>

<pallas_src>
import jax
import jax.numpy as jnp
from jax.experimental import pallas as pl
from jax.experimental.pallas import tpu as pltpu


# ---------------------------------------------------------------------------
# Kernel
# ---------------------------------------------------------------------------
def _deeponet_kernel(
    # input (one batch tile): concatenated [branch | trunk]
    x_ref,                   # (tile_b, b_in + t_in)
    # fused block-diagonal hidden layers
    w1_ref, b1_ref,          # (b_in + t_in, 2H), (1, 2H)
    w2_ref, b2_ref,          # (2H, 2H), (1, 2H)
    w3_ref, b3_ref,          # (2H, 2H), (1, 2H)
    # final fc (lane-padded)
    fcw_ref, fcb_ref,        # (H, out_pad), (1, out_pad)
    # output (lane-padded)
    out_ref,                 # (tile_b, out_pad)
):
    f32 = jnp.float32
    H = fcw_ref.shape[0]

    def dense(x, w_ref, b_ref):
        # Cast matmul inputs to the weight dtype (f32 or bf16); accumulate in
        # f32 on the MXU; bias add / activation stay f32 (v5e-safe: no bf16 VPU).
        return (
            jnp.dot(x.astype(w_ref.dtype), w_ref[...], preferred_element_type=f32)
            + b_ref[...]
        )

    # Three fused hidden layers: each is ONE wide MXU pass + tanh on (tile_b, 2H).
    h = jnp.tanh(dense(x_ref[...], w1_ref, b1_ref))     # (tile_b, 2H)
    h = jnp.tanh(dense(h, w2_ref, b2_ref))               # (tile_b, 2H)
    h = jnp.tanh(dense(h, w3_ref, b3_ref))               # (tile_b, 2H)

    # Elementwise product of branch/trunk halves (lane-aligned split at H=128k).
    f = h[:, :H] * h[:, H:]                               # (tile_b, H)

    # Final Linear into the lane-padded output.
    out_ref[...] = dense(f, fcw_ref, fcb_ref).astype(out_ref.dtype)


# ---------------------------------------------------------------------------
# Tile selection
# ---------------------------------------------------------------------------
def _auto_tile_b(B, max_tile=512):
    """Largest divisor of B that is <= max_tile and (== B or a multiple of 8)."""
    if B <= max_tile:
        return B
    for d in range(min(max_tile, B), 7, -1):
        if B % d == 0 and d % 8 == 0:
            return d
    return B  # fallback: whole batch in one tile (block == full dim is legal)


# ---------------------------------------------------------------------------
# Wrapper
# ---------------------------------------------------------------------------
def deeponet_forward(branch_input, trunk_input, params, *, tile_b=None,
                     weights_dtype=jnp.float32):
    """DeepONet forward.

    params: dict with pre-transposed weights (in, out) and biases (1, out):
      bw1,bb1,bw2,bb2,bw3,bb3, tw1,tb1,tw2,tb2,tw3,tb3, fcw,fcb

    tile_b: batch tile. None -> auto (largest divisor of B up to 512).
            On v7x prefer a value that keeps >= 2 grid steps (e.g. B // 2)
            so both TensorCores are used.
    weights_dtype: jnp.float32 or jnp.bfloat16 (bf16 recommended on v6e/v7x).
    """
    B, b_in = branch_input.shape
    B2, t_in = trunk_input.shape
    assert B == B2, "branch/trunk batch mismatch"

    H = params["bw2"].shape[0]
    out_dim = params["fcw"].shape[1]
    assert H % 128 == 0, "hidden_dim must be a multiple of 128 for the fused split"

    f32 = jnp.float32
    wdt = weights_dtype
    H2 = 2 * H

    def blockdiag(bw, tw, in_b, in_t):
        w = jnp.zeros((in_b + in_t, H2), wdt)
        w = w.at[:in_b, :H].set(bw.astype(wdt))
        w = w.at[in_b:, H:].set(tw.astype(wdt))
        return w

    def catbias(bb, tb):
        return jnp.concatenate([bb, tb], axis=1).astype(f32)

    # ---- fused block-diagonal hidden-layer params ----
    w1 = blockdiag(params["bw1"], params["tw1"], b_in, t_in)     # (b_in+t_in, 2H)
    b1 = catbias(params["bb1"], params["tb1"])                   # (1, 2H)
    w2 = blockdiag(params["bw2"], params["tw2"], H, H)           # (2H, 2H)
    b2 = catbias(params["bb2"], params["tb2"])
    w3 = blockdiag(params["bw3"], params["tw3"], H, H)           # (2H, 2H)
    b3 = catbias(params["bb3"], params["tb3"])

    # ---- lane-pad the final fc so stores are lane-dense (out_dim=9 -> 128) ----
    out_pad = ((out_dim + 127) // 128) * 128
    fcw = jnp.zeros((H, out_pad), wdt).at[:, :out_dim].set(params["fcw"].astype(wdt))
    fcb = jnp.zeros((1, out_pad), f32).at[:, :out_dim].set(params["fcb"].astype(f32))

    x_cat = jnp.concatenate([branch_input, trunk_input], axis=1)  # (B, b_in+t_in)

    # ---- tile the batch ----
    if tile_b is None:
        tile_b = _auto_tile_b(B)
    assert B % tile_b == 0, "batch must be divisible by tile_b"
    assert tile_b == B or tile_b % 8 == 0, "tile_b must be a multiple of 8 (or == B)"
    grid = (B // tile_b,)

    x_spec = pl.BlockSpec((tile_b, b_in + t_in), lambda i: (i, 0))
    out_spec = pl.BlockSpec((tile_b, out_pad), lambda i: (i, 0))

    def rep_spec(a):  # grid-invariant (replicated) parameter spec
        return pl.BlockSpec(a.shape, lambda i: (0, 0))

    weight_args = [w1, b1, w2, b2, w3, b3, fcw, fcb]
    param_specs = [rep_spec(a) for a in weight_args]

    kernel = pl.pallas_call(
        _deeponet_kernel,
        out_shape=jax.ShapeDtypeStruct((B, out_pad), f32),
        grid_spec=pltpu.PrefetchScalarGridSpec(
            num_scalar_prefetch=0,
            grid=grid,
            in_specs=[x_spec] + param_specs,
            out_specs=out_spec,
        ),
        compiler_params=pltpu.CompilerParams(
            dimension_semantics=("parallel",),
        ),
    )
    out_padded = kernel(x_cat, *weight_args)
    return out_padded[:, :out_dim]


# ---------------------------------------------------------------------------
# Deterministic parameter init (matches module shapes; synthetic, not a ckpt)
# ---------------------------------------------------------------------------
def init_params(key, branch_input_dim, trunk_input_dim, hidden_dim, out_dim):
    keys = jax.random.split(key, 7)
    k = iter(keys)

    def linear(kk, in_dim, out_d):
        kw, kb = jax.random.split(kk)
        bound = 1.0 / jnp.sqrt(in_dim)
        w = jax.random.uniform(kw, (in_dim, out_d), jnp.float32, -bound, bound)
        b = jax.random.uniform(kb, (1, out_d), jnp.float32, -bound, bound)
        return w, b

    p = {}
    p["bw1"], p["bb1"] = linear(next(k), branch_input_dim, hidden_dim)
    p["bw2"], p["bb2"] = linear(next(k), hidden_dim, hidden_dim)
    p["bw3"], p["bb3"] = linear(next(k), hidden_dim, hidden_dim)
    p["tw1"], p["tb1"] = linear(next(k), trunk_input_dim, hidden_dim)
    p["tw2"], p["tb2"] = linear(next(k), hidden_dim, hidden_dim)
    p["tw3"], p["tb3"] = linear(next(k), hidden_dim, hidden_dim)
    p["fcw"], p["fcb"] = linear(next(k), hidden_dim, out_dim)
    return p


# Pure-JAX reference for correctness check
def deeponet_ref(branch_input, trunk_input, p):
    b = branch_input
    for w, bias in [(p["bw1"], p["bb1"]), (p["bw2"], p["bb2"]), (p["bw3"], p["bb3"])]:
        b = jnp.tanh(b @ w + bias)
    t = trunk_input
    for w, bias in [(p["tw1"], p["tb1"]), (p["tw2"], p["tb2"]), (p["tw3"], p["tb3"])]:
        t = jnp.tanh(t @ w + bias)
    f = b * t
    return f @ p["fcw"] + p["fcb"]


if __name__ == "__main__":
    # Shapes consistent with the module defaults (out_dim=9, hidden=128).
    B = 256
    BRANCH_IN = 16
    TRUNK_IN = 2
    HIDDEN = 128
    OUT = 9

    key = jax.random.PRNGKey(0)
    k_bx, k_tx, k_p = jax.random.split(key, 3)

    branch_input = jax.random.normal(k_bx, (B, BRANCH_IN), jnp.float32)
    trunk_input = jax.random.normal(k_tx, (B, TRUNK_IN), jnp.float32)
    params = init_params(k_p, BRANCH_IN, TRUNK_IN, HIDDEN, OUT)

    ref = deeponet_ref(branch_input, trunk_input, params)

    # 1) f32 weights, auto tile (single grid step) -> strict check.
    out = deeponet_forward(branch_input, trunk_input, params)
    out = jax.block_until_ready(out)
    assert out.shape == (B, OUT)
    assert jnp.allclose(out, ref, atol=1e-5, rtol=1e-5), "f32 auto-tile mismatch"

    # 2) f32 weights, explicit 2 grid steps (v7x-style: >= 2 parallel steps).
    out2 = deeponet_forward(branch_input, trunk_input, params, tile_b=B // 2)
    out2 = jax.block_until_ready(out2)
    assert jnp.allclose(out2, ref, atol=1e-5, rtol=1e-5), "f32 2-step mismatch"

    # 3) bf16 weights (v6e/v7x fast path), f32 accumulation -> loose check.
    out3 = deeponet_forward(branch_input, trunk_input, params,
                            weights_dtype=jnp.bfloat16)
    out3 = jax.block_until_ready(out3)
    assert jnp.all(jnp.isfinite(out3))
    assert jnp.allclose(out3, ref, atol=1e-1, rtol=1e-1), "bf16 mismatch vs f32 ref"

    print("KERNEL_OK")
</pallas_src>

<mosaic_0001>
module attributes {stable_mosaic.version = 11 : i64} {
  func.func @_deeponet_kernel(%arg0: i32, %arg1: memref<256x18xf32, #tpu.memory_space<vmem>>, %arg2: memref<18x256xf32, #tpu.memory_space<vmem>>, %arg3: memref<1x256xf32, #tpu.memory_space<vmem>>, %arg4: memref<256x256xf32, #tpu.memory_space<vmem>>, %arg5: memref<1x256xf32, #tpu.memory_space<vmem>>, %arg6: memref<256x256xf32, #tpu.memory_space<vmem>>, %arg7: memref<1x256xf32, #tpu.memory_space<vmem>>, %arg8: memref<128x128xf32, #tpu.memory_space<vmem>>, %arg9: memref<1x128xf32, #tpu.memory_space<vmem>>, %arg10: memref<256x128xf32, #tpu.memory_space<vmem>>) attributes {dimension_semantics = [#tpu.dimension_semantics<parallel>], iteration_bounds = array<i64: 1>, scalar_prefetch = 0 : i64, scratch_operands = 0 : i64, tpu.core_type = #tpu.core_type<tc>, window_params = [{transform_indices = @transform_0, window_bounds = array<i64: 256, 18>}, {pipeline_mode = #tpu.pipeline_mode<synchronous>, transform_indices = @transform_1, window_bounds = array<i64: 18, 256>}, {pipeline_mode = #tpu.pipeline_mode<synchronous>, transform_indices = @transform_2, window_bounds = array<i64: 1, 256>}, {pipeline_mode = #tpu.pipeline_mode<synchronous>, transform_indices = @transform_3, window_bounds = array<i64: 256, 256>}, {pipeline_mode = #tpu.pipeline_mode<synchronous>, transform_indices = @transform_4, window_bounds = array<i64: 1, 256>}, {pipeline_mode = #tpu.pipeline_mode<synchronous>, transform_indices = @transform_5, window_bounds = array<i64: 256, 256>}, {pipeline_mode = #tpu.pipeline_mode<synchronous>, transform_indices = @transform_6, window_bounds = array<i64: 1, 256>}, {pipeline_mode = #tpu.pipeline_mode<synchronous>, transform_indices = @transform_7, window_bounds = array<i64: 128, 128>}, {pipeline_mode = #tpu.pipeline_mode<synchronous>, transform_indices = @transform_8, window_bounds = array<i64: 1, 128>}, {transform_indices = @transform_9, window_bounds = array<i64: 256, 128>}]} {
    %c0 = arith.constant 0 : index
    %c0_0 = arith.constant 0 : index
    %0 = vector.load %arg1[%c0, %c0_0] : memref<256x18xf32, #tpu.memory_space<vmem>>, vector<256x18xf32>
    %c0_1 = arith.constant 0 : index
    %c0_2 = arith.constant 0 : index
    %1 = vector.load %arg2[%c0_1, %c0_2] : memref<18x256xf32, #tpu.memory_space<vmem>>, vector<18x256xf32>
    %cst = arith.constant dense<0.000000e+00> : vector<256x256xf32>
    %2 = tpu.matmul %0, %1, %cst {dimension_numbers = #tpu.dot_dimension_numbers<[1], [0], [0], [1], [0, 0, 1, 1], [], []>} : vector<256x18xf32>, vector<18x256xf32>, vector<256x256xf32> -> vector<256x256xf32>
    %c0_3 = arith.constant 0 : index
    %c0_4 = arith.constant 0 : index
    %3 = vector.load %arg3[%c0_3, %c0_4] : memref<1x256xf32, #tpu.memory_space<vmem>>, vector<1x256xf32>
    %4 = vector.broadcast %3 : vector<1x256xf32> to vector<256x256xf32>
    %5 = arith.addf %2, %4 : vector<256x256xf32>
    %6 = math.tanh %5 : vector<256x256xf32>
    %c0_5 = arith.constant 0 : index
    %c0_6 = arith.constant 0 : index
    %7 = vector.load %arg4[%c0_5, %c0_6] : memref<256x256xf32, #tpu.memory_space<vmem>>, vector<256x256xf32>
    %cst_7 = arith.constant dense<0.000000e+00> : vector<256x256xf32>
    %8 = tpu.matmul %6, %7, %cst_7 {dimension_numbers = #tpu.dot_dimension_numbers<[1], [0], [0], [1], [0, 0, 1, 1], [], []>} : vector<256x256xf32>, vector<256x256xf32>, vector<256x256xf32> -> vector<256x256xf32>
    %c0_8 = arith.constant 0 : index
    %c0_9 = arith.constant 0 : index
    %9 = vector.load %arg5[%c0_8, %c0_9] : memref<1x256xf32, #tpu.memory_space<vmem>>, vector<1x256xf32>
    %10 = vector.broadcast %9 : vector<1x256xf32> to vector<256x256xf32>
    %11 = arith.addf %8, %10 : vector<256x256xf32>
    %12 = math.tanh %11 : vector<256x256xf32>
    %c0_10 = arith.constant 0 : index
    %c0_11 = arith.constant 0 : index
    %13 = vector.load %arg6[%c0_10, %c0_11] : memref<256x256xf32, #tpu.memory_space<vmem>>, vector<256x256xf32>
    %cst_12 = arith.constant dense<0.000000e+00> : vector<256x256xf32>
    %14 = tpu.matmul %12, %13, %cst_12 {dimension_numbers = #tpu.dot_dimension_numbers<[1], [0], [0], [1], [0, 0, 1, 1], [], []>} : vector<256x256xf32>, vector<256x256xf32>, vector<256x256xf32> -> vector<256x256xf32>
    %c0_13 = arith.constant 0 : index
    %c0_14 = arith.constant 0 : index
    %15 = vector.load %arg7[%c0_13, %c0_14] : memref<1x256xf32, #tpu.memory_space<vmem>>, vector<1x256xf32>
    %16 = vector.broadcast %15 : vector<1x256xf32> to vector<256x256xf32>
    %17 = arith.addf %14, %16 : vector<256x256xf32>
    %18 = math.tanh %17 : vector<256x256xf32>
    %19 = vector.extract_strided_slice %18 {offsets = [0, 0], sizes = [256, 128], strides = [1, 1]} : vector<256x256xf32> to vector<256x128xf32>
    %20 = vector.extract_strided_slice %18 {offsets = [0, 128], sizes = [256, 128], strides = [1, 1]} : vector<256x256xf32> to vector<256x128xf32>
    %21 = arith.mulf %19, %20 : vector<256x128xf32>
    %c0_15 = arith.constant 0 : index
    %c0_16 = arith.constant 0 : index
    %22 = vector.load %arg8[%c0_15, %c0_16] : memref<128x128xf32, #tpu.memory_space<vmem>>, vector<128x128xf32>
    %cst_17 = arith.constant dense<0.000000e+00> : vector<256x128xf32>
    %23 = tpu.matmul %21, %22, %cst_17 {dimension_numbers = #tpu.dot_dimension_numbers<[1], [0], [0], [1], [0, 0, 1, 1], [], []>} : vector<256x128xf32>, vector<128x128xf32>, vector<256x128xf32> -> vector<256x128xf32>
    %c0_18 = arith.constant 0 : index
    %c0_19 = arith.constant 0 : index
    %24 = vector.load %arg9[%c0_18, %c0_19] : memref<1x128xf32, #tpu.memory_space<vmem>>, vector<1x128xf32>
    %25 = vector.broadcast %24 : vector<1x128xf32> to vector<256x128xf32>
    %26 = arith.addf %23, %25 : vector<256x128xf32>
    %c0_20 = arith.constant 0 : index
    %c0_21 = arith.constant 0 : index
    %27 = vector.load %arg10[%c0_20, %c0_21] : memref<256x128xf32, #tpu.memory_space<vmem>>, vector<256x128xf32>
    tpu.vector_store %arg10[%c0_20, %c0_21], %26 {strides = array<i32>} : memref<256x128xf32, #tpu.memory_space<vmem>>, vector<256x128xf32>,
    return
  }
  func.func @transform_0(%arg0: i32) -> (i32, i32) {
    %c0_i32 = arith.constant 0 : i32
    %c0_i32_0 = arith.constant 0 : i32
    return %arg0, %c0_i32 : i32, i32
  }
  func.func @transform_1(%arg0: i32) -> (i32, i32) {
    %c0_i32 = arith.constant 0 : i32
    %c0_i32_0 = arith.constant 0 : i32
    %c0_i32_1 = arith.constant 0 : i32
    return %c0_i32, %c0_i32_0 : i32, i32
  }
  func.func @transform_2(%arg0: i32) -> (i32, i32) {
    %c0_i32 = arith.constant 0 : i32
    %c0_i32_0 = arith.constant 0 : i32
    %c0_i32_1 = arith.constant 0 : i32
    return %c0_i32, %c0_i32_0 : i32, i32
  }
  func.func @transform_3(%arg0: i32) -> (i32, i32) {
    %c0_i32 = arith.constant 0 : i32
    %c0_i32_0 = arith.constant 0 : i32
    %c0_i32_1 = arith.constant 0 : i32
    return %c0_i32, %c0_i32_0 : i32, i32
  }
  func.func @transform_4(%arg0: i32) -> (i32, i32) {
    %c0_i32 = arith.constant 0 : i32
    %c0_i32_0 = arith.constant 0 : i32
    %c0_i32_1 = arith.constant 0 : i32
    return %c0_i32, %c0_i32_0 : i32, i32
  }
  func.func @transform_5(%arg0: i32) -> (i32, i32) {
    %c0_i32 = arith.constant 0 : i32
    %c0_i32_0 = arith.constant 0 : i32
    %c0_i32_1 = arith.constant 0 : i32
    return %c0_i32, %c0_i32_0 : i32, i32
  }
  func.func @transform_6(%arg0: i32) -> (i32, i32) {
    %c0_i32 = arith.constant 0 : i32
    %c0_i32_0 = arith.constant 0 : i32
    %c0_i32_1 = arith.constant 0 : i32
    return %c0_i32, %c0_i32_0 : i32, i32
  }
  func.func @transform_7(%arg0: i32) -> (i32, i32) {
    %c0_i32 = arith.constant 0 : i32
    %c0_i32_0 = arith.constant 0 : i32
    %c0_i32_1 = arith.constant 0 : i32
    return %c0_i32, %c0_i32_0 : i32, i32
  }
  func.func @transform_8(%arg0: i32) -> (i32, i32) {
    %c0_i32 = arith.constant 0 : i32
    %c0_i32_0 = arith.constant 0 : i32
    %c0_i32_1 = arith.constant 0 : i32
    return %c0_i32, %c0_i32_0 : i32, i32
  }
  func.func @transform_9(%arg0: i32) -> (i32, i32) {
    %c0_i32 = arith.constant 0 : i32
    %c0_i32_0 = arith.constant 0 : i32
    return %arg0, %c0_i32 : i32, i32
  }
}

</mosaic_0001>

<llo_original>
// kernel: tpu_custom_call.1
$region0: #{tpu_custom_call.1}
  #allocation0 [shape = 'u32[]', space=smem, size = 0x4, offset = 0x4, fixed_abs, tag = 'smem constant byte address 0x4 - core index']
  #allocation1 [shape = 'u32[72,128]{1,0:T(1,128)}', space=vmem, size = 0x9000, scoped, tag = 'internal scratch']
  %s0 = inlined_call_operand.vmem [shape: f32[256,18], index: 0, kind: input, shape index: {}]
  %s1 = inlined_call_operand.vmem [shape: f32[18,256], index: 1, kind: input, shape index: {}]
  %s2 = inlined_call_operand.vmem [shape: f32[1,256], index: 2, kind: input, shape index: {}]
  %s3 = inlined_call_operand.hbm [shape: f32[256,256], index: 3, kind: input, shape index: {}]
  %s4 = inlined_call_operand.vmem [shape: f32[1,256], index: 4, kind: input, shape index: {}]
  %s5 = inlined_call_operand.hbm [shape: f32[256,256], index: 5, kind: input, shape index: {}]
  %s6 = inlined_call_operand.vmem [shape: f32[1,256], index: 6, kind: input, shape index: {}]
  %s7 = inlined_call_operand.vmem [shape: f32[128,128], index: 7, kind: input, shape index: {}]
  %s8 = inlined_call_operand.vmem [shape: f32[1,128], index: 8, kind: input, shape index: {}]
  %s9 = inlined_call_operand.hbm [shape: f32[256,128], index: 9, kind: output, shape index: {}]
  %s10 = sld [smem:[#allocation0]]
  $region54: #{tpu_custom_call.1} parent=0
    _
  %s12 = ssub.s32 1, %s10
  %s13 = scalar_select 0, %s12, %s10
  $region1: #{tpu_custom_call.1} parent=0
    #allocation2 [shape = 'u8[262144]{0}', space=vmem, size = 0x40000, scoped, tag = 'input window, operand 3, single buffered']
    #allocation3 [shape = 's32[1]{0}', space=sflag, size = 0x4, scoped, tag = 'scoped memory for tpu_custom_call.1']
    #allocation4 [shape = 's32[1]{0}', space=sflag, size = 0x4, scoped, tag = 'scoped memory for tpu_custom_call.1']
    #allocation5 [shape = 'u8[262144]{0}', space=vmem, size = 0x40000, scoped, tag = 'input window, operand 5, single buffered']
    #allocation6 [shape = 's32[1]{0}', space=sflag, size = 0x4, scoped, tag = 'scoped memory for tpu_custom_call.1']
    #allocation7 [shape = 'u8[131072]{0}', space=vmem, size = 0x20000, scoped, tag = 'output window, operand 0, single buffered']
    %14 = vsyncpa [#allocation3], 0
    %15 = vsyncpa [#allocation6], 0
    %16 = vsyncpa [#allocation4], 0
    // Predicated region
    $region2: #{tpu_custom_call.1} parent=1 // pred_check
      _
    $region3: #{tpu_custom_call.1} parent=1 // pred_check_branch
      %18 = sbr.rel (0) target = $region5
    $region4: #{tpu_custom_call.1} parent=1 // pred_region
      _
    $region5: #{tpu_custom_call.1} parent=1 // pred_fallthru
      _
    // Predicated region
    $region6: #{tpu_custom_call.1} parent=1 // pred_check
      _
    $region7: #{tpu_custom_call.1} parent=1 // pred_check_branch
      %20 = sbr.rel (0) target = $region9
    $region8: #{tpu_custom_call.1} parent=1 // pred_region
      _
    $region9: #{tpu_custom_call.1} parent=1 // pred_fallthru
      _
    // Predicated region
    $region10: #{tpu_custom_call.1} parent=1 // pred_check
      _
    $region11: #{tpu_custom_call.1} parent=1 // pred_check_branch
      %22 = sbr.rel (0) target = $region13
    $region12: #{tpu_custom_call.1} parent=1 // pred_region
      _
    $region13: #{tpu_custom_call.1} parent=1 // pred_fallthru
      _
    // Predicated region
    $region14: #{tpu_custom_call.1} parent=1 // pred_check
      _
    $region15: #{tpu_custom_call.1} parent=1 // pred_check_branch
      %24 = sbr.rel (0) target = $region17
    $region16: #{tpu_custom_call.1} parent=1 // pred_region
      %26 = vsyncadd [#allocation3], 0
      %s27 = sshll.u32 %s3, 4
      %s28 = int_to_ptr.hbm [resolvable:$true] %s27
      %s29 = sshll.u32 [#allocation2], 4
      %s30 = int_to_ptr.vmem [resolvable:$true] %s29
      %35 = dma.hbm_to_vmem [thread:$0]  %s28, 8192, %s30, [#allocation3], 256, 256, 16
    $region17: #{tpu_custom_call.1} parent=1 // pred_fallthru
      _
    // Predicated region
    $region18: #{tpu_custom_call.1} parent=1 // pred_check
      _
    $region19: #{tpu_custom_call.1} parent=1 // pred_check_branch
      %37 = sbr.rel (0) target = $region21
    $region20: #{tpu_custom_call.1} parent=1 // pred_region
      _
    $region21: #{tpu_custom_call.1} parent=1 // pred_fallthru
      _
    // Predicated region
    $region22: #{tpu_custom_call.1} parent=1 // pred_check
      _
    $region23: #{tpu_custom_call.1} parent=1 // pred_check_branch
      %39 = sbr.rel (0) target = $region25
    $region24: #{tpu_custom_call.1} parent=1 // pred_region
      %41 = vsyncadd [#allocation6], 0
      %s42 = sshll.u32 %s5, 4
      %s43 = int_to_ptr.hbm [resolvable:$true] %s42
      %s44 = sshll.u32 [#allocation5], 4
      %s45 = int_to_ptr.vmem [resolvable:$true] %s44
      %50 = dma.hbm_to_vmem [thread:$0]  %s43, 8192, %s45, [#allocation6], 256, 256, 16
    $region25: #{tpu_custom_call.1} parent=1 // pred_fallthru
      _
    // Predicated region
    $region26: #{tpu_custom_call.1} parent=1 // pred_check
      _
    $region27: #{tpu_custom_call.1} parent=1 // pred_check_branch
      %52 = sbr.rel (0) target = $region29
    $region28: #{tpu_custom_call.1} parent=1 // pred_region
      _
    $region29: #{tpu_custom_call.1} parent=1 // pred_fallthru
      _
    // Predicated region
    $region30: #{tpu_custom_call.1} parent=1 // pred_check
      _
    $region31: #{tpu_custom_call.1} parent=1 // pred_check_branch
      %54 = sbr.rel (0) target = $region33
    $region32: #{tpu_custom_call.1} parent=1 // pred_region
      _
    $region33: #{tpu_custom_call.1} parent=1 // pred_fallthru
      _
    // Predicated region
    $region34: #{tpu_custom_call.1} parent=1 // pred_check
      _
    $region35: #{tpu_custom_call.1} parent=1 // pred_check_branch
      %56 = sbr.rel (0) target = $region37
    $region36: #{tpu_custom_call.1} parent=1 // pred_region
      _
    $region37: #{tpu_custom_call.1} parent=1 // pred_fallthru
      _
    // Predicated region
    $region38: #{tpu_custom_call.1} parent=1 // pred_check
      _
    $region39: #{tpu_custom_call.1} parent=1 // pred_check_branch
      %58 = sbr.rel (0) target = $region41
    $region40: #{tpu_custom_call.1} parent=1 // pred_region
      %60 = dma.done [#allocation3], 8192
    $region41: #{tpu_custom_call.1} parent=1 // pred_fallthru
      _
    // Predicated region
    $region42: #{tpu_custom_call.1} parent=1 // pred_check
      _
    $region43: #{tpu_custom_call.1} parent=1 // pred_check_branch
      %62 = sbr.rel (0) target = $region45
    $region44: #{tpu_custom_call.1} parent=1 // pred_region
      %64 = dma.done [#allocation6], 8192
    $region45: #{tpu_custom_call.1} parent=1 // pred_fallthru
      _
    %v65 = vld [vmem:[%s0] sm:$0xff]
    %v66 = vld [vmem:[%s0 + $0x8] sm:$0xff]
    %v67 = vld [vmem:[%s0 + $0x10] sm:$0xff]
    %v68 = vld [vmem:[%s0 + $0x18] sm:$0xff]
    %v69 = vld [vmem:[%s0 + $0x20] sm:$0xff]
    %v70 = vld [vmem:[%s0 + $0x28] sm:$0xff]
    %v71 = vld [vmem:[%s0 + $0x30] sm:$0xff]
    %v72 = vld [vmem:[%s0 + $0x38] sm:$0xff]
    %v73 = vld [vmem:[%s0 + $0x40] sm:$0xff]
    %v74 = vld [vmem:[%s0 + $0x48] sm:$0xff]
    %v75 = vld [vmem:[%s0 + $0x50] sm:$0xff]
    %v76 = vld [vmem:[%s0 + $0x58] sm:$0xff]
    %v77 = vld [vmem:[%s0 + $0x60] sm:$0xff]
    %v78 = vld [vmem:[%s0 + $0x68] sm:$0xff]
    %v79 = vld [vmem:[%s0 + $0x70] sm:$0xff]
    %v80 = vld [vmem:[%s0 + $0x78] sm:$0xff]
    %v81 = vld [vmem:[%s0 + $0x80] sm:$0xff]
    %v82 = vld [vmem:[%s0 + $0x88] sm:$0xff]
    %v83 = vld [vmem:[%s0 + $0x90] sm:$0xff]
    %v84 = vld [vmem:[%s0 + $0x98] sm:$0xff]
    %v85 = vld [vmem:[%s0 + $0xa0] sm:$0xff]
    %v86 = vld [vmem:[%s0 + $0xa8] sm:$0xff]
    %v87 = vld [vmem:[%s0 + $0xb0] sm:$0xff]
    %v88 = vld [vmem:[%s0 + $0xb8] sm:$0xff]
    %v89 = vld [vmem:[%s0 + $0xc0] sm:$0xff]
    %v90 = vld [vmem:[%s0 + $0xc8] sm:$0xff]
    %v91 = vld [vmem:[%s0 + $0xd0] sm:$0xff]
    %v92 = vld [vmem:[%s0 + $0xd8] sm:$0xff]
    %v93 = vld [vmem:[%s0 + $0xe0] sm:$0xff]
    %v94 = vld [vmem:[%s0 + $0xe8] sm:$0xff]
    %v95 = vld [vmem:[%s0 + $0xf0] sm:$0xff]
    %v96 = vld [vmem:[%s0 + $0xf8] sm:$0xff]
    %v97 = vld [vmem:[%s1] sm:$0xff]
    %v98 = vld [vmem:[%s1 + $0x8] sm:$0xff]
    %v99 = vld [vmem:[%s1 + $0x10] sm:$0xff]
    %v100 = vld [vmem:[%s1 + $0x18] sm:$0xff]
    %v101 = vld [vmem:[%s1 + $0x20] sm:$0x3]
    %v102 = vld [vmem:[%s1 + $0x28] sm:$0x3]
    %v103 = vld [vmem:[%s2] sm:$0x3]
    %v105 = vperm.slane %v103, 0
    %v106 = vperm.slane %v103, 1
    %vm109 = vcmask 146432
    %v111 = vsel %vm109, %v65, 0
    %v114 = vsel %vm109, %v66, 0
    %v117 = vsel %vm109, %v67, 0
    %v120 = vsel %vm109, %v68, 0
    %v123 = vsel %vm109, %v69, 0
    %v126 = vsel %vm109, %v70, 0
    %v129 = vsel %vm109, %v71, 0
    %v132 = vsel %vm109, %v72, 0
    %v135 = vsel %vm109, %v73, 0
    %v138 = vsel %vm109, %v74, 0
    %v141 = vsel %vm109, %v75, 0
    %v144 = vsel %vm109, %v76, 0
    %v147 = vsel %vm109, %v77, 0
    %v150 = vsel %vm109, %v78, 0
    %v153 = vsel %vm109, %v79, 0
    %v156 = vsel %vm109, %v80, 0
    %v159 = vsel %vm109, %v81, 0
    %v162 = vsel %vm109, %v82, 0
    %v165 = vsel %vm109, %v83, 0
    %v168 = vsel %vm109, %v84, 0
    %v171 = vsel %vm109, %v85, 0
    %v174 = vsel %vm109, %v86, 0
    %v177 = vsel %vm109, %v87, 0
    %v180 = vsel %vm109, %v88, 0
    %v183 = vsel %vm109, %v89, 0
    %v186 = vsel %vm109, %v90, 0
    %v189 = vsel %vm109, %v91, 0
    %v192 = vsel %vm109, %v92, 0
    %v195 = vsel %vm109, %v93, 0
    %v198 = vsel %vm109, %v94, 0
    %v201 = vsel %vm109, %v95, 0
    %v204 = vsel %vm109, %v96, 0
    %vm206 = vcmask 1041408
    %v208 = vsel %vm206, %v101, 0
    %v211 = vsel %vm206, %v102, 0
    %213 = vmatpush.msra.mxu0 0.0
    %214 = vmatpush.msra.mxu0 0.0
    %215 = vmatpush.msra.mxu0 0.0
    %216 = vmatpush.msra.mxu0 0.0
    %217 = vmatpush.msra.mxu0 0.0
    %218 = vmatpush.msra.mxu0 0.0
    %219 = vmatpush.msra.mxu0 0.0
    %220 = vmatpush.msra.mxu0 0.0
    %221 = vmatpush.msra.mxu0 0.0
    %222 = vmatpush.msra.mxu0 0.0
    %223 = vmatpush.msra.mxu0 0.0
    %224 = vmatpush.msra.mxu0 0.0
    %225 = vmatpush.msra.mxu0 0.0
    %226 = vmatpush.msra.mxu0 %v208
    %227 = vmatpush.msra.mxu0 %v99
    %228 = vmatpush.msra.mxu0 %v97
    %229 = vmatmul.f32.gmra.mxu0 %v111
    %v230 = vpop.f32.mrf.mxu0
    %v231 = vadd.f32 %v105, %v230
    %232 = vmatmul.f32.gmra.mxu0 %v114
    %v233 = vpop.f32.mrf.mxu0
    %v234 = vadd.f32 %v105, %v233
    %235 = vmatmul.f32.gmra.mxu0 %v117
    %v236 = vpop.f32.mrf.mxu0
    %v237 = vadd.f32 %v105, %v236
    %238 = vmatmul.f32.gmra.mxu0 %v120
    %v239 = vpop.f32.mrf.mxu0
    %v240 = vadd.f32 %v105, %v239
    %241 = vmatmul.f32.gmra.mxu0 %v123
    %v242 = vpop.f32.mrf.mxu0
    %v243 = vadd.f32 %v105, %v242
    %244 = vmatmul.f32.gmra.mxu0 %v126
    %v245 = vpop.f32.mrf.mxu0
    %v246 = vadd.f32 %v105, %v245
    %247 = vmatmul.f32.gmra.mxu0 %v129
    %v248 = vpop.f32.mrf.mxu0
    %v249 = vadd.f32 %v105, %v248
    %250 = vmatmul.f32.gmra.mxu0 %v132
    %v251 = vpop.f32.mrf.mxu0
    %v252 = vadd.f32 %v105, %v251
    %253 = vmatmul.f32.gmra.mxu0 %v135
    %v254 = vpop.f32.mrf.mxu0
    %v255 = vadd.f32 %v105, %v254
    %256 = vmatmul.f32.gmra.mxu0 %v138
    %v257 = vpop.f32.mrf.mxu0
    %v258 = vadd.f32 %v105, %v257
    %259 = vmatmul.f32.gmra.mxu0 %v141
    %v260 = vpop.f32.mrf.mxu0
    %v261 = vadd.f32 %v105, %v260
    %262 = vmatmul.f32.gmra.mxu0 %v144
    %v263 = vpop.f32.mrf.mxu0
    %v264 = vadd.f32 %v105, %v263
    %265 = vmatmul.f32.gmra.mxu0 %v147
    %v266 = vpop.f32.mrf.mxu0
    %v267 = vadd.f32 %v105, %v266
    %268 = vmatmul.f32.gmra.mxu0 %v150
    %v269 = vpop.f32.mrf.mxu0
    %v270 = vadd.f32 %v105, %v269
    %271 = vmatmul.f32.gmra.mxu0 %v153
    %v272 = vpop.f32.mrf.mxu0
    %v273 = vadd.f32 %v105, %v272
    %274 = vmatmul.f32.gmra.mxu0 %v156
    %v275 = vpop.f32.mrf.mxu0
    %v276 = vadd.f32 %v105, %v275
    %277 = vmatmul.f32.gmra.mxu0 %v159
    %v278 = vpop.f32.mrf.mxu0
    %v279 = vadd.f32 %v105, %v278
    %280 = vmatmul.f32.gmra.mxu0 %v162
    %v281 = vpop.f32.mrf.mxu0
    %v282 = vadd.f32 %v105, %v281
    %283 = vmatmul.f32.gmra.mxu0 %v165
    %v284 = vpop.f32.mrf.mxu0
    %v285 = vadd.f32 %v105, %v284
    %286 = vmatmul.f32.gmra.mxu0 %v168
    %v287 = vpop.f32.mrf.mxu0
    %v288 = vadd.f32 %v105, %v287
    %289 = vmatmul.f32.gmra.mxu0 %v171
    %v290 = vpop.f32.mrf.mxu0
    %v291 = vadd.f32 %v105, %v290
    %292 = vmatmul.f32.gmra.mxu0 %v174
    %v293 = vpop.f32.mrf.mxu0
    %v294 = vadd.f32 %v105, %v293
    %295 = vmatmul.f32.gmra.mxu0 %v177
    %v296 = vpop.f32.mrf.mxu0
    %v297 = vadd.f32 %v105, %v296
    %298 = vmatmul.f32.gmra.mxu0 %v180
    %v299 = vpop.f32.mrf.mxu0
    %v300 = vadd.f32 %v105, %v299
    %301 = vmatmul.f32.gmra.mxu0 %v183
    %v302 = vpop.f32.mrf.mxu0
    %v303 = vadd.f32 %v105, %v302
    %304 = vmatmul.f32.gmra.mxu0 %v186
    %v305 = vpop.f32.mrf.mxu0
    %v306 = vadd.f32 %v105, %v305
    %307 = vmatmul.f32.gmra.mxu0 %v189
    %v308 = vpop.f32.mrf.mxu0
    %v309 = vadd.f32 %v105, %v308
    %310 = vmatmul.f32.gmra.mxu0 %v192
    %v311 = vpop.f32.mrf.mxu0
    %v312 = vadd.f32 %v105, %v311
    %313 = vmatmul.f32.gmra.mxu0 %v195
    %v314 = vpop.f32.mrf.mxu0
    %v315 = vadd.f32 %v105, %v314
    %316 = vmatmul.f32.gmra.mxu0 %v198
    %v317 = vpop.f32.mrf.mxu0
    %v318 = vadd.f32 %v105, %v317
    %319 = vmatmul.f32.gmra.mxu0 %v201
    %v320 = vpop.f32.mrf.mxu0
    %v321 = vadd.f32 %v105, %v320
    %322 = vmatmul.f32.gmra.mxu0 %v204
    %v323 = vpop.f32.mrf.mxu0
    %v324 = vadd.f32 %v105, %v323
    %325 = vdwg.mxu0
    %326 = vmatpush.msra.mxu0 0.0
    %327 = vmatpush.msra.mxu0 0.0
    %328 = vmatpush.msra.mxu0 0.0
    %329 = vmatpush.msra.mxu0 0.0
    %330 = vmatpush.msra.mxu0 0.0
    %331 = vmatpush.msra.mxu0 0.0
    %332 = vmatpush.msra.mxu0 0.0
    %333 = vmatpush.msra.mxu0 0.0
    %334 = vmatpush.msra.mxu0 0.0
    %335 = vmatpush.msra.mxu0 0.0
    %336 = vmatpush.msra.mxu0 0.0
    %337 = vmatpush.msra.mxu0 0.0
    %338 = vmatpush.msra.mxu0 0.0
    %339 = vmatpush.msra.mxu0 %v211
    %340 = vmatpush.msra.mxu0 %v100
    %341 = vmatpush.msra.mxu0 %v98
    %342 = vmatmul.f32.gmra.mxu0 %v111
    %v343 = vpop.f32.mrf.mxu0
    %v344 = vadd.f32 %v106, %v343
    %345 = vmatmul.f32.gmra.mxu0 %v114
    %v346 = vpop.f32.mrf.mxu0
    %v347 = vadd.f32 %v106, %v346
    %348 = vmatmul.f32.gmra.mxu0 %v117
    %v349 = vpop.f32.mrf.mxu0
    %v350 = vadd.f32 %v106, %v349
    %351 = vmatmul.f32.gmra.mxu0 %v120
    %v352 = vpop.f32.mrf.mxu0
    %v353 = vadd.f32 %v106, %v352
    %354 = vmatmul.f32.gmra.mxu0 %v123
    %v355 = vpop.f32.mrf.mxu0
    %v356 = vadd.f32 %v106, %v355
    %357 = vmatmul.f32.gmra.mxu0 %v126
    %v358 = vpop.f32.mrf.mxu0
    %v359 = vadd.f32 %v106, %v358
    %360 = vmatmul.f32.gmra.mxu0 %v129
    %v361 = vpop.f32.mrf.mxu0
    %v362 = vadd.f32 %v106, %v361
    %363 = vmatmul.f32.gmra.mxu0 %v132
    %v364 = vpop.f32.mrf.mxu0
    %v365 = vadd.f32 %v106, %v364
    %366 = vmatmul.f32.gmra.mxu0 %v135
    %v367 = vpop.f32.mrf.mxu0
    %v368 = vadd.f32 %v106, %v367
    %369 = vmatmul.f32.gmra.mxu0 %v138
    %v370 = vpop.f32.mrf.mxu0
    %v371 = vadd.f32 %v106, %v370
    %372 = vmatmul.f32.gmra.mxu0 %v141
    %v373 = vpop.f32.mrf.mxu0
    %v374 = vadd.f32 %v106, %v373
    %375 = vmatmul.f32.gmra.mxu0 %v144
    %v376 = vpop.f32.mrf.mxu0
    %v377 = vadd.f32 %v106, %v376
    %378 = vmatmul.f32.gmra.mxu0 %v147
    %v379 = vpop.f32.mrf.mxu0
    %v380 = vadd.f32 %v106, %v379
    %381 = vmatmul.f32.gmra.mxu0 %v150
    %v382 = vpop.f32.mrf.mxu0
    %v383 = vadd.f32 %v106, %v382
    %384 = vmatmul.f32.gmra.mxu0 %v153
    %v385 = vpop.f32.mrf.mxu0
    %v386 = vadd.f32 %v106, %v385
    %387 = vmatmul.f32.gmra.mxu0 %v156
    %v388 = vpop.f32.mrf.mxu0
    %v389 = vadd.f32 %v106, %v388
    %390 = vmatmul.f32.gmra.mxu0 %v159
    %v391 = vpop.f32.mrf.mxu0
    %v392 = vadd.f32 %v106, %v391
    %393 = vmatmul.f32.gmra.mxu0 %v162
    %v394 = vpop.f32.mrf.mxu0
    %v395 = vadd.f32 %v106, %v394
    %396 = vmatmul.f32.gmra.mxu0 %v165
    %v397 = vpop.f32.mrf.mxu0
    %v398 = vadd.f32 %v106, %v397
    %399 = vmatmul.f32.gmra.mxu0 %v168
    %v400 = vpop.f32.mrf.mxu0
    %v401 = vadd.f32 %v106, %v400
    %402 = vmatmul.f32.gmra.mxu0 %v171
    %v403 = vpop.f32.mrf.mxu0
    %v404 = vadd.f32 %v106, %v403
    %405 = vmatmul.f32.gmra.mxu0 %v174
    %v406 = vpop.f32.mrf.mxu0
    %v407 = vadd.f32 %v106, %v406
    %408 = vmatmul.f32.gmra.mxu0 %v177
    %v409 = vpop.f32.mrf.mxu0
    %v410 = vadd.f32 %v106, %v409
    %411 = vmatmul.f32.gmra.mxu0 %v180
    %v412 = vpop.f32.mrf.mxu0
    %v413 = vadd.f32 %v106, %v412
    %414 = vmatmul.f32.gmra.mxu0 %v183
    %v415 = vpop.f32.mrf.mxu0
    %v416 = vadd.f32 %v106, %v415
    %417 = vmatmul.f32.gmra.mxu0 %v186
    %v418 = vpop.f32.mrf.mxu0
    %v419 = vadd.f32 %v106, %v418
    %420 = vmatmul.f32.gmra.mxu0 %v189
    %v421 = vpop.f32.mrf.mxu0
    %v422 = vadd.f32 %v106, %v421
    %423 = vmatmul.f32.gmra.mxu0 %v192
    %v424 = vpop.f32.mrf.mxu0
    %v425 = vadd.f32 %v106, %v424
    %426 = vmatmul.f32.gmra.mxu0 %v195
    %v427 = vpop.f32.mrf.mxu0
    %v428 = vadd.f32 %v106, %v427
    %429 = vmatmul.f32.gmra.mxu0 %v198
    %v430 = vpop.f32.mrf.mxu0
    %v431 = vadd.f32 %v106, %v430
    %432 = vmatmul.f32.gmra.mxu0 %v201
    %v433 = vpop.f32.mrf.mxu0
    %v434 = vadd.f32 %v106, %v433
    %435 = vmatmul.f32.gmra.mxu0 %v204
    %v436 = vpop.f32.mrf.mxu0
    %v437 = vadd.f32 %v106, %v436
    %438 = vdwg.mxu0
    %v439 = vtanh.pop %v231
    %v440 = vtanh.pop %v344
    %v441 = vtanh.pop %v234
    %v442 = vtanh.pop %v347
    %v443 = vtanh.pop %v237
    %v444 = vtanh.pop %v350
    %v445 = vtanh.pop %v240
    %v446 = vtanh.pop %v353
    %v447 = vtanh.pop %v243
    %v448 = vtanh.pop %v356
    %v449 = vtanh.pop %v246
    %v450 = vtanh.pop %v359
    %v451 = vtanh.pop %v249
    %v452 = vtanh.pop %v362
    %v453 = vtanh.pop %v252
    %v454 = vtanh.pop %v365
    %v455 = vtanh.pop %v255
    %v456 = vtanh.pop %v368
    %v457 = vtanh.pop %v258
    %v458 = vtanh.pop %v371
    %v459 = vtanh.pop %v261
    %v460 = vtanh.pop %v374
    %v461 = vtanh.pop %v264
    %v462 = vtanh.pop %v377
    %v463 = vtanh.pop %v267
    %v464 = vtanh.pop %v380
    %v465 = vtanh.pop %v270
    %v466 = vtanh.pop %v383
    %v467 = vtanh.pop %v273
    %v468 = vtanh.pop %v386
    %v469 = vtanh.pop %v276
    %v470 = vtanh.pop %v389
    %v471 = vtanh.pop %v279
    %v472 = vtanh.pop %v392
    %v473 = vtanh.pop %v282
    %v474 = vtanh.pop %v395
    %v475 = vtanh.pop %v285
    %v476 = vtanh.pop %v398
    %v477 = vtanh.pop %v288
    %v478 = vtanh.pop %v401
    %v479 = vtanh.pop %v291
    %v480 = vtanh.pop %v404
    %v481 = vtanh.pop %v294
    %v482 = vtanh.pop %v407
    %v483 = vtanh.pop %v297
    %v484 = vtanh.pop %v410
    %v485 = vtanh.pop %v300
    %v486 = vtanh.pop %v413
    %v487 = vtanh.pop %v303
    %v488 = vtanh.pop %v416
    %v489 = vtanh.pop %v306
    %v490 = vtanh.pop %v419
    %v491 = vtanh.pop %v309
    %v492 = vtanh.pop %v422
    %v493 = vtanh.pop %v312
    %v494 = vtanh.pop %v425
    %v495 = vtanh.pop %v315
    %v496 = vtanh.pop %v428
    %v497 = vtanh.pop %v318
    %v498 = vtanh.pop %v431
    %v499 = vtanh.pop %v321
    %v500 = vtanh.pop %v434
    %v501 = vtanh.pop %v324
    %v502 = vtanh.pop %v437
    %v503 = vld [vmem:[#allocation2] sm:$0xff]
    %v504 = vld [vmem:[#allocation2 + $0x8] sm:$0xff]
    %v505 = vld [vmem:[#allocation2 + $0x10] sm:$0xff]
    %v506 = vld [vmem:[#allocation2 + $0x18] sm:$0xff]
    %v507 = vld [vmem:[#allocation2 + $0x20] sm:$0xff]
    %v508 = vld [vmem:[#allocation2 + $0x28] sm:$0xff]
    %v509 = vld [vmem:[#allocation2 + $0x30] sm:$0xff]
    %v510 = vld [vmem:[#allocation2 + $0x38] sm:$0xff]
    %v511 = vld [vmem:[#allocation2 + $0x40] sm:$0xff]
    %v512 = vld [vmem:[#allocation2 + $0x48] sm:$0xff]
    %v513 = vld [vmem:[#allocation2 + $0x50] sm:$0xff]
    %v514 = vld [vmem:[#allocation2 + $0x58] sm:$0xff]
    %v515 = vld [vmem:[#allocation2 + $0x60] sm:$0xff]
    %v516 = vld [vmem:[#allocation2 + $0x68] sm:$0xff]
    %v517 = vld [vmem:[#allocation2 + $0x70] sm:$0xff]
    %v518 = vld [vmem:[#allocation2 + $0x78] sm:$0xff]
    %v519 = vld [vmem:[#allocation2 + $0x80] sm:$0xff]
    %v520 = vld [vmem:[#allocation2 + $0x88] sm:$0xff]
    %v521 = vld [vmem:[#allocation2 + $0x90] sm:$0xff]
    %v522 = vld [vmem:[#allocation2 + $0x98] sm:$0xff]
    %v523 = vld [vmem:[#allocation2 + $0xa0] sm:$0xff]
    %v524 = vld [vmem:[#allocation2 + $0xa8] sm:$0xff]
    %v525 = vld [vmem:[#allocation2 + $0xb0] sm:$0xff]
    %v526 = vld [vmem:[#allocation2 + $0xb8] sm:$0xff]
    %v527 = vld [vmem:[#allocation2 + $0xc0] sm:$0xff]
    %v528 = vld [vmem:[#allocation2 + $0xc8] sm:$0xff]
    %v529 = vld [vmem:[#allocation2 + $0xd0] sm:$0xff]
    %v530 = vld [vmem:[#allocation2 + $0xd8] sm:$0xff]
    %v531 = vld [vmem:[#allocation2 + $0xe0] sm:$0xff]
    %v532 = vld [vmem:[#allocation2 + $0xe8] sm:$0xff]
    %v533 = vld [vmem:[#allocation2 + $0xf0] sm:$0xff]
    %v534 = vld [vmem:[#allocation2 + $0xf8] sm:$0xff]
    %v535 = vld [vmem:[#allocation2 + $0x100] sm:$0xff]
    %v536 = vld [vmem:[#allocation2 + $0x108] sm:$0xff]
    %v537 = vld [vmem:[#allocation2 + $0x110] sm:$0xff]
    %v538 = vld [vmem:[#allocation2 + $0x118] sm:$0xff]
    %v539 = vld [vmem:[#allocation2 + $0x120] sm:$0xff]
    %v540 = vld [vmem:[#allocation2 + $0x128] sm:$0xff]
    %v541 = vld [vmem:[#allocation2 + $0x130] sm:$0xff]
    %v542 = vld [vmem:[#allocation2 + $0x138] sm:$0xff]
    %v543 = vld [vmem:[#allocation2 + $0x140] sm:$0xff]
    %v544 = vld [vmem:[#allocation2 + $0x148] sm:$0xff]
    %v545 = vld [vmem:[#allocation2 + $0x150] sm:$0xff]
    %v546 = vld [vmem:[#allocation2 + $0x158] sm:$0xff]
    %v547 = vld [vmem:[#allocation2 + $0x160] sm:$0xff]
    %v548 = vld [vmem:[#allocation2 + $0x168] sm:$0xff]
    %v549 = vld [vmem:[#allocation2 + $0x170] sm:$0xff]
    %v550 = vld [vmem:[#allocation2 + $0x178] sm:$0xff]
    %v551 = vld [vmem:[#allocation2 + $0x180] sm:$0xff]
    %v552 = vld [vmem:[#allocation2 + $0x188] sm:$0xff]
    %v553 = vld [vmem:[#allocation2 + $0x190] sm:$0xff]
    %v554 = vld [vmem:[#allocation2 + $0x198] sm:$0xff]
    %v555 = vld [vmem:[#allocation2 + $0x1a0] sm:$0xff]
    %v556 = vld [vmem:[#allocation2 + $0x1a8] sm:$0xff]
    %v557 = vld [vmem:[#allocation2 + $0x1b0] sm:$0xff]
    %v558 = vld [vmem:[#allocation2 + $0x1b8] sm:$0xff]
    %v559 = vld [vmem:[#allocation2 + $0x1c0] sm:$0xff]
    %v560 = vld [vmem:[#allocation2 + $0x1c8] sm:$0xff]
    %v561 = vld [vmem:[#allocation2 + $0x1d0] sm:$0xff]
    %v562 = vld [vmem:[#allocation2 + $0x1d8] sm:$0xff]
    %v563 = vld [vmem:[#allocation2 + $0x1e0] sm:$0xff]
    %v564 = vld [vmem:[#allocation2 + $0x1e8] sm:$0xff]
    %v565 = vld [vmem:[#allocation2 + $0x1f0] sm:$0xff]
    %v566 = vld [vmem:[#allocation2 + $0x1f8] sm:$0xff]
    %v567 = vld [vmem:[%s4] sm:$0x3]
    %v569 = vperm.slane %v567, 0
    %v570 = vperm.slane %v567, 1
    %573 = vmatpush.msra.mxu0 %v533
    %574 = vmatpush.msra.mxu0 %v531
    %575 = vmatpush.msra.mxu0 %v529
    %576 = vmatpush.msra.mxu0 %v527
    %577 = vmatpush.msra.mxu0 %v525
    %578 = vmatpush.msra.mxu0 %v523
    %579 = vmatpush.msra.mxu0 %v521
    %580 = vmatpush.msra.mxu0 %v519
    %581 = vmatpush.msra.mxu0 %v517
    %582 = vmatpush.msra.mxu0 %v515
    %583 = vmatpush.msra.mxu0 %v513
    %584 = vmatpush.msra.mxu0 %v511
    %585 = vmatpush.msra.mxu0 %v509
    %586 = vmatpush.msra.mxu0 %v507
    %587 = vmatpush.msra.mxu0 %v505
    %588 = vmatpush.msra.mxu0 %v503
    %589 = vmatmul.f32.gmra.mxu0 %v439
    %v590 = vpop.f32.mrf.mxu0
    %v591 = vadd.f32 %v569, %v590
    %592 = vmatmul.f32.gmra.mxu0 %v441
    %v593 = vpop.f32.mrf.mxu0
    %v594 = vadd.f32 %v569, %v593
    %595 = vmatmul.f32.gmra.mxu0 %v443
    %v596 = vpop.f32.mrf.mxu0
    %v597 = vadd.f32 %v569, %v596
    %598 = vmatmul.f32.gmra.mxu0 %v445
    %v599 = vpop.f32.mrf.mxu0
    %v600 = vadd.f32 %v569, %v599
    %601 = vmatmul.f32.gmra.mxu0 %v447
    %v602 = vpop.f32.mrf.mxu0
    %v603 = vadd.f32 %v569, %v602
    %604 = vmatmul.f32.gmra.mxu0 %v449
    %v605 = vpop.f32.mrf.mxu0
    %v606 = vadd.f32 %v569, %v605
    %607 = vmatmul.f32.gmra.mxu0 %v451
    %v608 = vpop.f32.mrf.mxu0
    %v609 = vadd.f32 %v569, %v608
    %610 = vmatmul.f32.gmra.mxu0 %v453
    %v611 = vpop.f32.mrf.mxu0
    %v612 = vadd.f32 %v569, %v611
    %613 = vmatmul.f32.gmra.mxu0 %v455
    %v614 = vpop.f32.mrf.mxu0
    %v615 = vadd.f32 %v569, %v614
    %616 = vmatmul.f32.gmra.mxu0 %v457
    %v617 = vpop.f32.mrf.mxu0
    %v618 = vadd.f32 %v569, %v617
    %619 = vmatmul.f32.gmra.mxu0 %v459
    %v620 = vpop.f32.mrf.mxu0
    %v621 = vadd.f32 %v569, %v620
    %622 = vmatmul.f32.gmra.mxu0 %v461
    %v623 = vpop.f32.mrf.mxu0
    %v624 = vadd.f32 %v569, %v623
    %625 = vmatmul.f32.gmra.mxu0 %v463
    %v626 = vpop.f32.mrf.mxu0
    %v627 = vadd.f32 %v569, %v626
    %628 = vmatmul.f32.gmra.mxu0 %v465
    %v629 = vpop.f32.mrf.mxu0
    %v630 = vadd.f32 %v569, %v629
    %631 = vmatmul.f32.gmra.mxu0 %v467
    %v632 = vpop.f32.mrf.mxu0
    %v633 = vadd.f32 %v569, %v632
    %634 = vmatmul.f32.gmra.mxu0 %v469
    %v635 = vpop.f32.mrf.mxu0
    %v636 = vadd.f32 %v569, %v635
    %637 = vmatmul.f32.gmra.mxu0 %v471
    %v638 = vpop.f32.mrf.mxu0
    %v639 = vadd.f32 %v569, %v638
    %640 = vmatmul.f32.gmra.mxu0 %v473
    %v641 = vpop.f32.mrf.mxu0
    %v642 = vadd.f32 %v569, %v641
    %643 = vmatmul.f32.gmra.mxu0 %v475
    %v644 = vpop.f32.mrf.mxu0
    %v645 = vadd.f32 %v569, %v644
    %646 = vmatmul.f32.gmra.mxu0 %v477
    %v647 = vpop.f32.mrf.mxu0
    %v648 = vadd.f32 %v569, %v647
    %649 = vmatmul.f32.gmra.mxu0 %v479
    %v650 = vpop.f32.mrf.mxu0
    %v651 = vadd.f32 %v569, %v650
    %652 = vmatmul.f32.gmra.mxu0 %v481
    %v653 = vpop.f32.mrf.mxu0
    %v654 = vadd.f32 %v569, %v653
    %655 = vmatmul.f32.gmra.mxu0 %v483
    %v656 = vpop.f32.mrf.mxu0
    %v657 = vadd.f32 %v569, %v656
    %658 = vmatmul.f32.gmra.mxu0 %v485
    %v659 = vpop.f32.mrf.mxu0
    %v660 = vadd.f32 %v569, %v659
    %661 = vmatmul.f32.gmra.mxu0 %v487
    %v662 = vpop.f32.mrf.mxu0
    %v663 = vadd.f32 %v569, %v662
    %664 = vmatmul.f32.gmra.mxu0 %v489
    %v665 = vpop.f32.mrf.mxu0
    %v666 = vadd.f32 %v569, %v665
    %667 = vmatmul.f32.gmra.mxu0 %v491
    %v668 = vpop.f32.mrf.mxu0
    %v669 = vadd.f32 %v569, %v668
    %670 = vmatmul.f32.gmra.mxu0 %v493
    %v671 = vpop.f32.mrf.mxu0
    %v672 = vadd.f32 %v569, %v671
    %673 = vmatmul.f32.gmra.mxu0 %v495
    %v674 = vpop.f32.mrf.mxu0
    %v675 = vadd.f32 %v569, %v674
    %676 = vmatmul.f32.gmra.mxu0 %v497
    %v677 = vpop.f32.mrf.mxu0
    %v678 = vadd.f32 %v569, %v677
    %679 = vmatmul.f32.gmra.mxu0 %v499
    %v680 = vpop.f32.mrf.mxu0
    %v681 = vadd.f32 %v569, %v680
    %682 = vmatmul.f32.gmra.mxu0 %v501
    %v683 = vpop.f32.mrf.mxu0
    %v684 = vadd.f32 %v569, %v683
    %685 = vdwg.mxu0
    %686 = vmatpush.msra.mxu0 %v565
    %687 = vmatpush.msra.mxu0 %v563
    %688 = vmatpush.msra.mxu0 %v561
    %689 = vmatpush.msra.mxu0 %v559
    %690 = vmatpush.msra.mxu0 %v557
    %691 = vmatpush.msra.mxu0 %v555
    %692 = vmatpush.msra.mxu0 %v553
    %693 = vmatpush.msra.mxu0 %v551
    %694 = vmatpush.msra.mxu0 %v549
    %695 = vmatpush.msra.mxu0 %v547
    %696 = vmatpush.msra.mxu0 %v545
    %697 = vmatpush.msra.mxu0 %v543
    %698 = vmatpush.msra.mxu0 %v541
    %699 = vmatpush.msra.mxu0 %v539
    %700 = vmatpush.msra.mxu0 %v537
    %701 = vmatpush.msra.mxu0 %v535
    %702 = vmatmul.f32.gmra.mxu0 %v440
    %v703 = vpop.f32.mrf.mxu0
    %v704 = vadd.f32 %v591, %v703
    %705 = vmatmul.f32.gmra.mxu0 %v442
    %v706 = vpop.f32.mrf.mxu0
    %v707 = vadd.f32 %v594, %v706
    %708 = vmatmul.f32.gmra.mxu0 %v444
    %v709 = vpop.f32.mrf.mxu0
    %v710 = vadd.f32 %v597, %v709
    %711 = vmatmul.f32.gmra.mxu0 %v446
    %v712 = vpop.f32.mrf.mxu0
    %v713 = vadd.f32 %v600, %v712
    %714 = vmatmul.f32.gmra.mxu0 %v448
    %v715 = vpop.f32.mrf.mxu0
    %v716 = vadd.f32 %v603, %v715
    %717 = vmatmul.f32.gmra.mxu0 %v450
    %v718 = vpop.f32.mrf.mxu0
    %v719 = vadd.f32 %v606, %v718
    %720 = vmatmul.f32.gmra.mxu0 %v452
    %v721 = vpop.f32.mrf.mxu0
    %v722 = vadd.f32 %v609, %v721
    %723 = vmatmul.f32.gmra.mxu0 %v454
    %v724 = vpop.f32.mrf.mxu0
    %v725 = vadd.f32 %v612, %v724
    %726 = vmatmul.f32.gmra.mxu0 %v456
    %v727 = vpop.f32.mrf.mxu0
    %v728 = vadd.f32 %v615, %v727
    %729 = vmatmul.f32.gmra.mxu0 %v458
    %v730 = vpop.f32.mrf.mxu0
    %v731 = vadd.f32 %v618, %v730
    %732 = vmatmul.f32.gmra.mxu0 %v460
    %v733 = vpop.f32.mrf.mxu0
    %v734 = vadd.f32 %v621, %v733
    %735 = vmatmul.f32.gmra.mxu0 %v462
    %v736 = vpop.f32.mrf.mxu0
    %v737 = vadd.f32 %v624, %v736
    %738 = vmatmul.f32.gmra.mxu0 %v464
    %v739 = vpop.f32.mrf.mxu0
    %v740 = vadd.f32 %v627, %v739
    %741 = vmatmul.f32.gmra.mxu0 %v466
    %v742 = vpop.f32.mrf.mxu0
    %v743 = vadd.f32 %v630, %v742
    %744 = vmatmul.f32.gmra.mxu0 %v468
    %v745 = vpop.f32.mrf.mxu0
    %v746 = vadd.f32 %v633, %v745
    %747 = vmatmul.f32.gmra.mxu0 %v470
    %v748 = vpop.f32.mrf.mxu0
    %v749 = vadd.f32 %v636, %v748
    %750 = vmatmul.f32.gmra.mxu0 %v472
    %v751 = vpop.f32.mrf.mxu0
    %v752 = vadd.f32 %v639, %v751
    %753 = vmatmul.f32.gmra.mxu0 %v474
    %v754 = vpop.f32.mrf.mxu0
    %v755 = vadd.f32 %v642, %v754
    %756 = vmatmul.f32.gmra.mxu0 %v476
    %v757 = vpop.f32.mrf.mxu0
    %v758 = vadd.f32 %v645, %v757
    %759 = vmatmul.f32.gmra.mxu0 %v478
    %v760 = vpop.f32.mrf.mxu0
    %v761 = vadd.f32 %v648, %v760
    %762 = vmatmul.f32.gmra.mxu0 %v480
    %v763 = vpop.f32.mrf.mxu0
    %v764 = vadd.f32 %v651, %v763
    %765 = vmatmul.f32.gmra.mxu0 %v482
    %v766 = vpop.f32.mrf.mxu0
    %v767 = vadd.f32 %v654, %v766
    %768 = vmatmul.f32.gmra.mxu0 %v484
    %v769 = vpop.f32.mrf.mxu0
    %v770 = vadd.f32 %v657, %v769
    %771 = vmatmul.f32.gmra.mxu0 %v486
    %v772 = vpop.f32.mrf.mxu0
    %v773 = vadd.f32 %v660, %v772
    %774 = vmatmul.f32.gmra.mxu0 %v488
    %v775 = vpop.f32.mrf.mxu0
    %v776 = vadd.f32 %v663, %v775
    %777 = vmatmul.f32.gmra.mxu0 %v490
    %v778 = vpop.f32.mrf.mxu0
    %v779 = vadd.f32 %v666, %v778
    %780 = vmatmul.f32.gmra.mxu0 %v492
    %v781 = vpop.f32.mrf.mxu0
    %v782 = vadd.f32 %v669, %v781
    %783 = vmatmul.f32.gmra.mxu0 %v494
    %v784 = vpop.f32.mrf.mxu0
    %v785 = vadd.f32 %v672, %v784
    %786 = vmatmul.f32.gmra.mxu0 %v496
    %v787 = vpop.f32.mrf.mxu0
    %v788 = vadd.f32 %v675, %v787
    %789 = vmatmul.f32.gmra.mxu0 %v498
    %v790 = vpop.f32.mrf.mxu0
    %v791 = vadd.f32 %v678, %v790
    %792 = vmatmul.f32.gmra.mxu0 %v500
    %v793 = vpop.f32.mrf.mxu0
    %v794 = vadd.f32 %v681, %v793
    %795 = vmatmul.f32.gmra.mxu0 %v502
    %v796 = vpop.f32.mrf.mxu0
    %v797 = vadd.f32 %v684, %v796
    %798 = vdwg.mxu0
    %799 = vmatpush.msra.mxu0 %v534
    %800 = vmatpush.msra.mxu0 %v532
    %801 = vmatpush.msra.mxu0 %v530
    %802 = vmatpush.msra.mxu0 %v528
    %803 = vmatpush.msra.mxu0 %v526
    %804 = vmatpush.msra.mxu0 %v524
    %805 = vmatpush.msra.mxu0 %v522
    %806 = vmatpush.msra.mxu0 %v520
    %807 = vmatpush.msra.mxu0 %v518
    %808 = vmatpush.msra.mxu0 %v516
    %809 = vmatpush.msra.mxu0 %v514
    %810 = vmatpush.msra.mxu0 %v512
    %811 = vmatpush.msra.mxu0 %v510
    %812 = vmatpush.msra.mxu0 %v508
    %813 = vmatpush.msra.mxu0 %v506
    %814 = vmatpush.msra.mxu0 %v504
    %815 = vmatmul.f32.gmra.mxu0 %v439
    %v816 = vpop.f32.mrf.mxu0
    %v817 = vadd.f32 %v570, %v816
    %818 = vmatmul.f32.gmra.mxu0 %v441
    %v819 = vpop.f32.mrf.mxu0
    %v820 = vadd.f32 %v570, %v819
    %821 = vmatmul.f32.gmra.mxu0 %v443
    %v822 = vpop.f32.mrf.mxu0
    %v823 = vadd.f32 %v570, %v822
    %824 = vmatmul.f32.gmra.mxu0 %v445
    %v825 = vpop.f32.mrf.mxu0
    %v826 = vadd.f32 %v570, %v825
    %827 = vmatmul.f32.gmra.mxu0 %v447
    %v828 = vpop.f32.mrf.mxu0
    %v829 = vadd.f32 %v570, %v828
    %830 = vmatmul.f32.gmra.mxu0 %v449
    %v831 = vpop.f32.mrf.mxu0
    %v832 = vadd.f32 %v570, %v831
    %833 = vmatmul.f32.gmra.mxu0 %v451
    %v834 = vpop.f32.mrf.mxu0
    %v835 = vadd.f32 %v570, %v834
    %836 = vmatmul.f32.gmra.mxu0 %v453
    %v837 = vpop.f32.mrf.mxu0
    %v838 = vadd.f32 %v570, %v837
    %839 = vmatmul.f32.gmra.mxu0 %v455
    %v840 = vpop.f32.mrf.mxu0
    %v841 = vadd.f32 %v570, %v840
    %842 = vmatmul.f32.gmra.mxu0 %v457
    %v843 = vpop.f32.mrf.mxu0
    %v844 = vadd.f32 %v570, %v843
    %845 = vmatmul.f32.gmra.mxu0 %v459
    %v846 = vpop.f32.mrf.mxu0
    %v847 = vadd.f32 %v570, %v846
    %848 = vmatmul.f32.gmra.mxu0 %v461
    %v849 = vpop.f32.mrf.mxu0
    %v850 = vadd.f32 %v570, %v849
    %851 = vmatmul.f32.gmra.mxu0 %v463
    %v852 = vpop.f32.mrf.mxu0
    %v853 = vadd.f32 %v570, %v852
    %854 = vmatmul.f32.gmra.mxu0 %v465
    %v855 = vpop.f32.mrf.mxu0
    %v856 = vadd.f32 %v570, %v855
    %857 = vmatmul.f32.gmra.mxu0 %v467
    %v858 = vpop.f32.mrf.mxu0
    %v859 = vadd.f32 %v570, %v858
    %860 = vmatmul.f32.gmra.mxu0 %v469
    %v861 = vpop.f32.mrf.mxu0
    %v862 = vadd.f32 %v570, %v861
    %863 = vmatmul.f32.gmra.mxu0 %v471
    %v864 = vpop.f32.mrf.mxu0
    %v865 = vadd.f32 %v570, %v864
    %866 = vmatmul.f32.gmra.mxu0 %v473
    %v867 = vpop.f32.mrf.mxu0
    %v868 = vadd.f32 %v570, %v867
    %869 = vmatmul.f32.gmra.mxu0 %v475
    %v870 = vpop.f32.mrf.mxu0
    %v871 = vadd.f32 %v570, %v870
    %872 = vmatmul.f32.gmra.mxu0 %v477
    %v873 = vpop.f32.mrf.mxu0
    %v874 = vadd.f32 %v570, %v873
    %875 = vmatmul.f32.gmra.mxu0 %v479
    %v876 = vpop.f32.mrf.mxu0
    %v877 = vadd.f32 %v570, %v876
    %878 = vmatmul.f32.gmra.mxu0 %v481
    %v879 = vpop.f32.mrf.mxu0
    %v880 = vadd.f32 %v570, %v879
    %881 = vmatmul.f32.gmra.mxu0 %v483
    %v882 = vpop.f32.mrf.mxu0
    %v883 = vadd.f32 %v570, %v882
    %884 = vmatmul.f32.gmra.mxu0 %v485
    %v885 = vpop.f32.mrf.mxu0
    %v886 = vadd.f32 %v570, %v885
    %887 = vmatmul.f32.gmra.mxu0 %v487
    %v888 = vpop.f32.mrf.mxu0
    %v889 = vadd.f32 %v570, %v888
    %890 = vmatmul.f32.gmra.mxu0 %v489
    %v891 = vpop.f32.mrf.mxu0
    %v892 = vadd.f32 %v570, %v891
    %893 = vmatmul.f32.gmra.mxu0 %v491
    %v894 = vpop.f32.mrf.mxu0
    %v895 = vadd.f32 %v570, %v894
    %896 = vmatmul.f32.gmra.mxu0 %v493
    %v897 = vpop.f32.mrf.mxu0
    %v898 = vadd.f32 %v570, %v897
    %899 = vmatmul.f32.gmra.mxu0 %v495
    %v900 = vpop.f32.mrf.mxu0
    %v901 = vadd.f32 %v570, %v900
    %902 = vmatmul.f32.gmra.mxu0 %v497
    %v903 = vpop.f32.mrf.mxu0
    %v904 = vadd.f32 %v570, %v903
    %905 = vmatmul.f32.gmra.mxu0 %v499
    %v906 = vpop.f32.mrf.mxu0
    %v907 = vadd.f32 %v570, %v906
    %908 = vmatmul.f32.gmra.mxu0 %v501
    %v909 = vpop.f32.mrf.mxu0
    %v910 = vadd.f32 %v570, %v909
    %911 = vdwg.mxu0
    %912 = vmatpush.msra.mxu0 %v566
    %913 = vmatpush.msra.mxu0 %v564
    %914 = vmatpush.msra.mxu0 %v562
    %915 = vmatpush.msra.mxu0 %v560
    %916 = vmatpush.msra.mxu0 %v558
    %917 = vmatpush.msra.mxu0 %v556
    %918 = vmatpush.msra.mxu0 %v554
    %919 = vmatpush.msra.mxu0 %v552
    %920 = vmatpush.msra.mxu0 %v550
    %921 = vmatpush.msra.mxu0 %v548
    %922 = vmatpush.msra.mxu0 %v546
    %923 = vmatpush.msra.mxu0 %v544
    %924 = vmatpush.msra.mxu0 %v542
    %925 = vmatpush.msra.mxu0 %v540
    %926 = vmatpush.msra.mxu0 %v538
    %927 = vmatpush.msra.mxu0 %v536
    %928 = vmatmul.f32.gmra.mxu0 %v440
    %v929 = vpop.f32.mrf.mxu0
    %v930 = vadd.f32 %v817, %v929
    %931 = vmatmul.f32.gmra.mxu0 %v442
    %v932 = vpop.f32.mrf.mxu0
    %v933 = vadd.f32 %v820, %v932
    %934 = vmatmul.f32.gmra.mxu0 %v444
    %v935 = vpop.f32.mrf.mxu0
    %v936 = vadd.f32 %v823, %v935
    %937 = vmatmul.f32.gmra.mxu0 %v446
    %v938 = vpop.f32.mrf.mxu0
    %v939 = vadd.f32 %v826, %v938
    %940 = vmatmul.f32.gmra.mxu0 %v448
    %v941 = vpop.f32.mrf.mxu0
    %v942 = vadd.f32 %v829, %v941
    %943 = vmatmul.f32.gmra.mxu0 %v450
    %v944 = vpop.f32.mrf.mxu0
    %v945 = vadd.f32 %v832, %v944
    %946 = vmatmul.f32.gmra.mxu0 %v452
    %v947 = vpop.f32.mrf.mxu0
    %v948 = vadd.f32 %v835, %v947
    %949 = vmatmul.f32.gmra.mxu0 %v454
    %v950 = vpop.f32.mrf.mxu0
    %v951 = vadd.f32 %v838, %v950
    %952 = vmatmul.f32.gmra.mxu0 %v456
    %v953 = vpop.f32.mrf.mxu0
    %v954 = vadd.f32 %v841, %v953
    %955 = vmatmul.f32.gmra.mxu0 %v458
    %v956 = vpop.f32.mrf.mxu0
    %v957 = vadd.f32 %v844, %v956
    %958 = vmatmul.f32.gmra.mxu0 %v460
    %v959 = vpop.f32.mrf.mxu0
    %v960 = vadd.f32 %v847, %v959
    %961 = vmatmul.f32.gmra.mxu0 %v462
    %v962 = vpop.f32.mrf.mxu0
    %v963 = vadd.f32 %v850, %v962
    %964 = vmatmul.f32.gmra.mxu0 %v464
    %v965 = vpop.f32.mrf.mxu0
    %v966 = vadd.f32 %v853, %v965
    %967 = vmatmul.f32.gmra.mxu0 %v466
    %v968 = vpop.f32.mrf.mxu0
    %v969 = vadd.f32 %v856, %v968
    %970 = vmatmul.f32.gmra.mxu0 %v468
    %v971 = vpop.f32.mrf.mxu0
    %v972 = vadd.f32 %v859, %v971
    %973 = vmatmul.f32.gmra.mxu0 %v470
    %v974 = vpop.f32.mrf.mxu0
    %v975 = vadd.f32 %v862, %v974
    %976 = vmatmul.f32.gmra.mxu0 %v472
    %v977 = vpop.f32.mrf.mxu0
    %v978 = vadd.f32 %v865, %v977
    %979 = vmatmul.f32.gmra.mxu0 %v474
    %v980 = vpop.f32.mrf.mxu0
    %v981 = vadd.f32 %v868, %v980
    %982 = vmatmul.f32.gmra.mxu0 %v476
    %v983 = vpop.f32.mrf.mxu0
    %v984 = vadd.f32 %v871, %v983
    %985 = vmatmul.f32.gmra.mxu0 %v478
    %v986 = vpop.f32.mrf.mxu0
    %v987 = vadd.f32 %v874, %v986
    %988 = vmatmul.f32.gmra.mxu0 %v480
    %v989 = vpop.f32.mrf.mxu0
    %v990 = vadd.f32 %v877, %v989
    %991 = vmatmul.f32.gmra.mxu0 %v482
    %v992 = vpop.f32.mrf.mxu0
    %v993 = vadd.f32 %v880, %v992
    %994 = vmatmul.f32.gmra.mxu0 %v484
    %v995 = vpop.f32.mrf.mxu0
    %v996 = vadd.f32 %v883, %v995
    %997 = vmatmul.f32.gmra.mxu0 %v486
    %v998 = vpop.f32.mrf.mxu0
    %v999 = vadd.f32 %v886, %v998
    %1000 = vmatmul.f32.gmra.mxu0 %v488
    %v1001 = vpop.f32.mrf.mxu0
    %v1002 = vadd.f32 %v889, %v1001
    %1003 = vmatmul.f32.gmra.mxu0 %v490
    %v1004 = vpop.f32.mrf.mxu0
    %v1005 = vadd.f32 %v892, %v1004
    %1006 = vmatmul.f32.gmra.mxu0 %v492
    %v1007 = vpop.f32.mrf.mxu0
    %v1008 = vadd.f32 %v895, %v1007
    %1009 = vmatmul.f32.gmra.mxu0 %v494
    %v1010 = vpop.f32.mrf.mxu0
    %v1011 = vadd.f32 %v898, %v1010
    %1012 = vmatmul.f32.gmra.mxu0 %v496
    %v1013 = vpop.f32.mrf.mxu0
    %v1014 = vadd.f32 %v901, %v1013
    %1015 = vmatmul.f32.gmra.mxu0 %v498
    %v1016 = vpop.f32.mrf.mxu0
    %v1017 = vadd.f32 %v904, %v1016
    %1018 = vmatmul.f32.gmra.mxu0 %v500
    %v1019 = vpop.f32.mrf.mxu0
    %v1020 = vadd.f32 %v907, %v1019
    %1021 = vmatmul.f32.gmra.mxu0 %v502
    %v1022 = vpop.f32.mrf.mxu0
    %v1023 = vadd.f32 %v910, %v1022
    %1024 = vdwg.mxu0
    %v1025 = vtanh.pop %v704
    %v1026 = vtanh.pop %v930
    %v1027 = vtanh.pop %v707
    %v1028 = vtanh.pop %v933
    %v1029 = vtanh.pop %v710
    %v1030 = vtanh.pop %v936
    %v1031 = vtanh.pop %v713
    %v1032 = vtanh.pop %v939
    %v1033 = vtanh.pop %v716
    %v1034 = vtanh.pop %v942
    %v1035 = vtanh.pop %v719
    %v1036 = vtanh.pop %v945
    %v1037 = vtanh.pop %v722
    %v1038 = vtanh.pop %v948
    %v1039 = vtanh.pop %v725
    %v1040 = vtanh.pop %v951
    %v1041 = vtanh.pop %v728
    %v1042 = vtanh.pop %v954
    %v1043 = vtanh.pop %v731
    %v1044 = vtanh.pop %v957
    %v1045 = vtanh.pop %v734
    %v1046 = vtanh.pop %v960
    %v1047 = vtanh.pop %v737
    %v1048 = vtanh.pop %v963
    %v1049 = vtanh.pop %v740
    %v1050 = vtanh.pop %v966
    %v1051 = vtanh.pop %v743
    %v1052 = vtanh.pop %v969
    %v1053 = vtanh.pop %v746
    %v1054 = vtanh.pop %v972
    %v1055 = vtanh.pop %v749
    %v1056 = vtanh.pop %v975
    %v1057 = vtanh.pop %v752
    %v1058 = vtanh.pop %v978
    %v1059 = vtanh.pop %v755
    %v1060 = vtanh.pop %v981
    %v1061 = vtanh.pop %v758
    %v1062 = vtanh.pop %v984
    %v1063 = vtanh.pop %v761
    %v1064 = vtanh.pop %v987
    %v1065 = vtanh.pop %v764
    %v1066 = vtanh.pop %v990
    %v1067 = vtanh.pop %v767
    %v1068 = vtanh.pop %v993
    %v1069 = vtanh.pop %v770
    %v1070 = vtanh.pop %v996
    %v1071 = vtanh.pop %v773
    %v1072 = vtanh.pop %v999
    %v1073 = vtanh.pop %v776
    %v1074 = vtanh.pop %v1002
    %v1075 = vtanh.pop %v779
    %v1076 = vtanh.pop %v1005
    %v1077 = vtanh.pop %v782
    %v1078 = vtanh.pop %v1008
    %v1079 = vtanh.pop %v785
    %v1080 = vtanh.pop %v1011
    %v1081 = vtanh.pop %v788
    %v1082 = vtanh.pop %v1014
    %v1083 = vtanh.pop %v791
    %v1084 = vtanh.pop %v1017
    %v1085 = vtanh.pop %v794
    %v1086 = vtanh.pop %v1020
    %v1087 = vtanh.pop %v797
    %v1088 = vtanh.pop %v1023
    %v1089 = vld [vmem:[#allocation5] sm:$0xff]
    %v1090 = vld [vmem:[#allocation5 + $0x8] sm:$0xff]
    %v1091 = vld [vmem:[#allocation5 + $0x10] sm:$0xff]
    %v1092 = vld [vmem:[#allocation5 + $0x18] sm:$0xff]
    %v1093 = vld [vmem:[#allocation5 + $0x20] sm:$0xff]
    %v1094 = vld [vmem:[#allocation5 + $0x28] sm:$0xff]
    %v1095 = vld [vmem:[#allocation5 + $0x30] sm:$0xff]
    %v1096 = vld [vmem:[#allocation5 + $0x38] sm:$0xff]
    %v1097 = vld [vmem:[#allocation5 + $0x40] sm:$0xff]
    %v1098 = vld [vmem:[#allocation5 + $0x48] sm:$0xff]
    %v1099 = vld [vmem:[#allocation5 + $0x50] sm:$0xff]
    %v1100 = vld [vmem:[#allocation5 + $0x58] sm:$0xff]
    %v1101 = vld [vmem:[#allocation5 + $0x60] sm:$0xff]
    %v1102 = vld [vmem:[#allocation5 + $0x68] sm:$0xff]
    %v1103 = vld [vmem:[#allocation5 + $0x70] sm:$0xff]
    %v1104 = vld [vmem:[#allocation5 + $0x78] sm:$0xff]
    %v1105 = vld [vmem:[#allocation5 + $0x80] sm:$0xff]
    %v1106 = vld [vmem:[#allocation5 + $0x88] sm:$0xff]
    %v1107 = vld [vmem:[#allocation5 + $0x90] sm:$0xff]
    %v1108 = vld [vmem:[#allocation5 + $0x98] sm:$0xff]
    %v1109 = vld [vmem:[#allocation5 + $0xa0] sm:$0xff]
    %v1110 = vld [vmem:[#allocation5 + $0xa8] sm:$0xff]
    %v1111 = vld [vmem:[#allocation5 + $0xb0] sm:$0xff]
    %v1112 = vld [vmem:[#allocation5 + $0xb8] sm:$0xff]
    %v1113 = vld [vmem:[#allocation5 + $0xc0] sm:$0xff]
    %v1114 = vld [vmem:[#allocation5 + $0xc8] sm:$0xff]
    %v1115 = vld [vmem:[#allocation5 + $0xd0] sm:$0xff]
    %v1116 = vld [vmem:[#allocation5 + $0xd8] sm:$0xff]
    %v1117 = vld [vmem:[#allocation5 + $0xe0] sm:$0xff]
    %v1118 = vld [vmem:[#allocation5 + $0xe8] sm:$0xff]
    %v1119 = vld [vmem:[#allocation5 + $0xf0] sm:$0xff]
    %v1120 = vld [vmem:[#allocation5 + $0xf8] sm:$0xff]
    %v1121 = vld [vmem:[#allocation5 + $0x100] sm:$0xff]
    %v1122 = vld [vmem:[#allocation5 + $0x108] sm:$0xff]
    %v1123 = vld [vmem:[#allocation5 + $0x110] sm:$0xff]
    %v1124 = vld [vmem:[#allocation5 + $0x118] sm:$0xff]
    %v1125 = vld [vmem:[#allocation5 + $0x120] sm:$0xff]
    %v1126 = vld [vmem:[#allocation5 + $0x128] sm:$0xff]
    %v1127 = vld [vmem:[#allocation5 + $0x130] sm:$0xff]
    %v1128 = vld [vmem:[#allocation5 + $0x138] sm:$0xff]
    %v1129 = vld [vmem:[#allocation5 + $0x140] sm:$0xff]
    %v1130 = vld [vmem:[#allocation5 + $0x148] sm:$0xff]
    %v1131 = vld [vmem:[#allocation5 + $0x150] sm:$0xff]
    %v1132 = vld [vmem:[#allocation5 + $0x158] sm:$0xff]
    %v1133 = vld [vmem:[#allocation5 + $0x160] sm:$0xff]
    %v1134 = vld [vmem:[#allocation5 + $0x168] sm:$0xff]
    %v1135 = vld [vmem:[#allocation5 + $0x170] sm:$0xff]
    %v1136 = vld [vmem:[#allocation5 + $0x178] sm:$0xff]
    %v1137 = vld [vmem:[#allocation5 + $0x180] sm:$0xff]
    %v1138 = vld [vmem:[#allocation5 + $0x188] sm:$0xff]
    %v1139 = vld [vmem:[#allocation5 + $0x190] sm:$0xff]
    %v1140 = vld [vmem:[#allocation5 + $0x198] sm:$0xff]
    %v1141 = vld [vmem:[#allocation5 + $0x1a0] sm:$0xff]
    %v1142 = vld [vmem:[#allocation5 + $0x1a8] sm:$0xff]
    %v1143 = vld [vmem:[#allocation5 + $0x1b0] sm:$0xff]
    %v1144 = vld [vmem:[#allocation5 + $0x1b8] sm:$0xff]
    %v1145 = vld [vmem:[#allocation5 + $0x1c0] sm:$0xff]
    %v1146 = vld [vmem:[#allocation5 + $0x1c8] sm:$0xff]
    %v1147 = vld [vmem:[#allocation5 + $0x1d0] sm:$0xff]
    %v1148 = vld [vmem:[#allocation5 + $0x1d8] sm:$0xff]
    %v1149 = vld [vmem:[#allocation5 + $0x1e0] sm:$0xff]
    %v1150 = vld [vmem:[#allocation5 + $0x1e8] sm:$0xff]
    %v1151 = vld [vmem:[#allocation5 + $0x1f0] sm:$0xff]
    %v1152 = vld [vmem:[#allocation5 + $0x1f8] sm:$0xff]
    %v1153 = vld [vmem:[%s6] sm:$0x3]
    %v1155 = vperm.slane %v1153, 0
    %v1156 = vperm.slane %v1153, 1
    %1159 = vmatpush.msra.mxu0 %v1119
    %1160 = vmatpush.msra.mxu0 %v1117
    %1161 = vmatpush.msra.mxu0 %v1115
    %1162 = vmatpush.msra.mxu0 %v1113
    %1163 = vmatpush.msra.mxu0 %v1111
    %1164 = vmatpush.msra.mxu0 %v1109
    %1165 = vmatpush.msra.mxu0 %v1107
    %1166 = vmatpush.msra.mxu0 %v1105
    %1167 = vmatpush.msra.mxu0 %v1103
    %1168 = vmatpush.msra.mxu0 %v1101
    %1169 = vmatpush.msra.mxu0 %v1099
    %1170 = vmatpush.msra.mxu0 %v1097
    %1171 = vmatpush.msra.mxu0 %v1095
    %1172 = vmatpush.msra.mxu0 %v1093
    %1173 = vmatpush.msra.mxu0 %v1091
    %1174 = vmatpush.msra.mxu0 %v1089
    %1175 = vmatmul.f32.gmra.mxu0 %v1025
    %v1176 = vpop.f32.mrf.mxu0
    %v1177 = vadd.f32 %v1155, %v1176
    %1178 = vmatmul.f32.gmra.mxu0 %v1027
    %v1179 = vpop.f32.mrf.mxu0
    %v1180 = vadd.f32 %v1155, %v1179
    %1181 = vmatmul.f32.gmra.mxu0 %v1029
    %v1182 = vpop.f32.mrf.mxu0
    %v1183 = vadd.f32 %v1155, %v1182
    %1184 = vmatmul.f32.gmra.mxu0 %v1031
    %v1185 = vpop.f32.mrf.mxu0
    %v1186 = vadd.f32 %v1155, %v1185
    %1187 = vmatmul.f32.gmra.mxu0 %v1033
    %v1188 = vpop.f32.mrf.mxu0
    %v1189 = vadd.f32 %v1155, %v1188
    %1190 = vmatmul.f32.gmra.mxu0 %v1035
    %v1191 = vpop.f32.mrf.mxu0
    %v1192 = vadd.f32 %v1155, %v1191
    %1193 = vmatmul.f32.gmra.mxu0 %v1037
    %v1194 = vpop.f32.mrf.mxu0
    %v1195 = vadd.f32 %v1155, %v1194
    %1196 = vmatmul.f32.gmra.mxu0 %v1039
    %v1197 = vpop.f32.mrf.mxu0
    %v1198 = vadd.f32 %v1155, %v1197
    %1199 = vmatmul.f32.gmra.mxu0 %v1041
    %v1200 = vpop.f32.mrf.mxu0
    %v1201 = vadd.f32 %v1155, %v1200
    %1202 = vmatmul.f32.gmra.mxu0 %v1043
    %v1203 = vpop.f32.mrf.mxu0
    %v1204 = vadd.f32 %v1155, %v1203
    %1205 = vmatmul.f32.gmra.mxu0 %v1045
    %v1206 = vpop.f32.mrf.mxu0
    %v1207 = vadd.f32 %v1155, %v1206
    %1208 = vmatmul.f32.gmra.mxu0 %v1047
    %v1209 = vpop.f32.mrf.mxu0
    %v1210 = vadd.f32 %v1155, %v1209
    %1211 = vmatmul.f32.gmra.mxu0 %v1049
    %v1212 = vpop.f32.mrf.mxu0
    %v1213 = vadd.f32 %v1155, %v1212
    %1214 = vmatmul.f32.gmra.mxu0 %v1051
    %v1215 = vpop.f32.mrf.mxu0
    %v1216 = vadd.f32 %v1155, %v1215
    %1217 = vmatmul.f32.gmra.mxu0 %v1053
    %v1218 = vpop.f32.mrf.mxu0
    %v1219 = vadd.f32 %v1155, %v1218
    %1220 = vmatmul.f32.gmra.mxu0 %v1055
    %v1221 = vpop.f32.mrf.mxu0
    %v1222 = vadd.f32 %v1155, %v1221
    %1223 = vmatmul.f32.gmra.mxu0 %v1057
    %v1224 = vpop.f32.mrf.mxu0
    %v1225 = vadd.f32 %v1155, %v1224
    %1226 = vmatmul.f32.gmra.mxu0 %v1059
    %v1227 = vpop.f32.mrf.mxu0
    %v1228 = vadd.f32 %v1155, %v1227
    %1229 = vmatmul.f32.gmra.mxu0 %v1061
    %v1230 = vpop.f32.mrf.mxu0
    %v1231 = vadd.f32 %v1155, %v1230
    %1232 = vmatmul.f32.gmra.mxu0 %v1063
    %v1233 = vpop.f32.mrf.mxu0
    %v1234 = vadd.f32 %v1155, %v1233
    %1235 = vmatmul.f32.gmra.mxu0 %v1065
    %v1236 = vpop.f32.mrf.mxu0
    %v1237 = vadd.f32 %v1155, %v1236
    %1238 = vmatmul.f32.gmra.mxu0 %v1067
    %v1239 = vpop.f32.mrf.mxu0
    %v1240 = vadd.f32 %v1155, %v1239
    %1241 = vmatmul.f32.gmra.mxu0 %v1069
    %v1242 = vpop.f32.mrf.mxu0
    %v1243 = vadd.f32 %v1155, %v1242
    %1244 = vmatmul.f32.gmra.mxu0 %v1071
    %v1245 = vpop.f32.mrf.mxu0
    %v1246 = vadd.f32 %v1155, %v1245
    %1247 = vmatmul.f32.gmra.mxu0 %v1073
    %v1248 = vpop.f32.mrf.mxu0
    %v1249 = vadd.f32 %v1155, %v1248
    %1250 = vmatmul.f32.gmra.mxu0 %v1075
    %v1251 = vpop.f32.mrf.mxu0
    %v1252 = vadd.f32 %v1155, %v1251
    %1253 = vmatmul.f32.gmra.mxu0 %v1077
    %v1254 = vpop.f32.mrf.mxu0
    %v1255 = vadd.f32 %v1155, %v1254
    %1256 = vmatmul.f32.gmra.mxu0 %v1079
    %v1257 = vpop.f32.mrf.mxu0
    %v1258 = vadd.f32 %v1155, %v1257
    %1259 = vmatmul.f32.gmra.mxu0 %v1081
    %v1260 = vpop.f32.mrf.mxu0
    %v1261 = vadd.f32 %v1155, %v1260
    %1262 = vmatmul.f32.gmra.mxu0 %v1083
    %v1263 = vpop.f32.mrf.mxu0
    %v1264 = vadd.f32 %v1155, %v1263
    %1265 = vmatmul.f32.gmra.mxu0 %v1085
    %v1266 = vpop.f32.mrf.mxu0
    %v1267 = vadd.f32 %v1155, %v1266
    %1268 = vmatmul.f32.gmra.mxu0 %v1087
    %v1269 = vpop.f32.mrf.mxu0
    %v1270 = vadd.f32 %v1155, %v1269
    %1271 = vdwg.mxu0
    %1272 = vmatpush.msra.mxu0 %v1151
    %1273 = vmatpush.msra.mxu0 %v1149
    %1274 = vmatpush.msra.mxu0 %v1147
    %1275 = vmatpush.msra.mxu0 %v1145
    %1276 = vmatpush.msra.mxu0 %v1143
    %1277 = vmatpush.msra.mxu0 %v1141
    %1278 = vmatpush.msra.mxu0 %v1139
    %1279 = vmatpush.msra.mxu0 %v1137
    %1280 = vmatpush.msra.mxu0 %v1135
    %1281 = vmatpush.msra.mxu0 %v1133
    %1282 = vmatpush.msra.mxu0 %v1131
    %1283 = vmatpush.msra.mxu0 %v1129
    %1284 = vmatpush.msra.mxu0 %v1127
    %1285 = vmatpush.msra.mxu0 %v1125
    %1286 = vmatpush.msra.mxu0 %v1123
    %1287 = vmatpush.msra.mxu0 %v1121
    %1288 = vmatmul.f32.gmra.mxu0 %v1026
    %v1289 = vpop.f32.mrf.mxu0
    %v1290 = vadd.f32 %v1177, %v1289
    %1291 = vmatmul.f32.gmra.mxu0 %v1028
    %v1292 = vpop.f32.mrf.mxu0
    %v1293 = vadd.f32 %v1180, %v1292
    %1294 = vmatmul.f32.gmra.mxu0 %v1030
    %v1295 = vpop.f32.mrf.mxu0
    %v1296 = vadd.f32 %v1183, %v1295
    %1297 = vmatmul.f32.gmra.mxu0 %v1032
    %v1298 = vpop.f32.mrf.mxu0
    %v1299 = vadd.f32 %v1186, %v1298
    %1300 = vmatmul.f32.gmra.mxu0 %v1034
    %v1301 = vpop.f32.mrf.mxu0
    %v1302 = vadd.f32 %v1189, %v1301
    %1303 = vmatmul.f32.gmra.mxu0 %v1036
    %v1304 = vpop.f32.mrf.mxu0
    %v1305 = vadd.f32 %v1192, %v1304
    %1306 = vmatmul.f32.gmra.mxu0 %v1038
    %v1307 = vpop.f32.mrf.mxu0
    %v1308 = vadd.f32 %v1195, %v1307
    %1309 = vmatmul.f32.gmra.mxu0 %v1040
    %v1310 = vpop.f32.mrf.mxu0
    %v1311 = vadd.f32 %v1198, %v1310
    %1312 = vmatmul.f32.gmra.mxu0 %v1042
    %v1313 = vpop.f32.mrf.mxu0
    %v1314 = vadd.f32 %v1201, %v1313
    %1315 = vmatmul.f32.gmra.mxu0 %v1044
    %v1316 = vpop.f32.mrf.mxu0
    %v1317 = vadd.f32 %v1204, %v1316
    %1318 = vmatmul.f32.gmra.mxu0 %v1046
    %v1319 = vpop.f32.mrf.mxu0
    %v1320 = vadd.f32 %v1207, %v1319
    %1321 = vmatmul.f32.gmra.mxu0 %v1048
    %v1322 = vpop.f32.mrf.mxu0
    %v1323 = vadd.f32 %v1210, %v1322
    %1324 = vmatmul.f32.gmra.mxu0 %v1050
    %v1325 = vpop.f32.mrf.mxu0
    %v1326 = vadd.f32 %v1213, %v1325
    %1327 = vmatmul.f32.gmra.mxu0 %v1052
    %v1328 = vpop.f32.mrf.mxu0
    %v1329 = vadd.f32 %v1216, %v1328
    %1330 = vmatmul.f32.gmra.mxu0 %v1054
    %v1331 = vpop.f32.mrf.mxu0
    %v1332 = vadd.f32 %v1219, %v1331
    %1333 = vmatmul.f32.gmra.mxu0 %v1056
    %v1334 = vpop.f32.mrf.mxu0
    %v1335 = vadd.f32 %v1222, %v1334
    %1336 = vmatmul.f32.gmra.mxu0 %v1058
    %v1337 = vpop.f32.mrf.mxu0
    %v1338 = vadd.f32 %v1225, %v1337
    %1339 = vmatmul.f32.gmra.mxu0 %v1060
    %v1340 = vpop.f32.mrf.mxu0
    %v1341 = vadd.f32 %v1228, %v1340
    %1342 = vmatmul.f32.gmra.mxu0 %v1062
    %v1343 = vpop.f32.mrf.mxu0
    %v1344 = vadd.f32 %v1231, %v1343
    %1345 = vmatmul.f32.gmra.mxu0 %v1064
    %v1346 = vpop.f32.mrf.mxu0
    %v1347 = vadd.f32 %v1234, %v1346
    %1348 = vmatmul.f32.gmra.mxu0 %v1066
    %v1349 = vpop.f32.mrf.mxu0
    %v1350 = vadd.f32 %v1237, %v1349
    %1351 = vmatmul.f32.gmra.mxu0 %v1068
    %v1352 = vpop.f32.mrf.mxu0
    %v1353 = vadd.f32 %v1240, %v1352
    %1354 = vmatmul.f32.gmra.mxu0 %v1070
    %v1355 = vpop.f32.mrf.mxu0
    %v1356 = vadd.f32 %v1243, %v1355
    %1357 = vmatmul.f32.gmra.mxu0 %v1072
    %v1358 = vpop.f32.mrf.mxu0
    %v1359 = vadd.f32 %v1246, %v1358
    %1360 = vmatmul.f32.gmra.mxu0 %v1074
    %v1361 = vpop.f32.mrf.mxu0
    %v1362 = vadd.f32 %v1249, %v1361
    %1363 = vmatmul.f32.gmra.mxu0 %v1076
    %v1364 = vpop.f32.mrf.mxu0
    %v1365 = vadd.f32 %v1252, %v1364
    %1366 = vmatmul.f32.gmra.mxu0 %v1078
    %v1367 = vpop.f32.mrf.mxu0
    %v1368 = vadd.f32 %v1255, %v1367
    %1369 = vmatmul.f32.gmra.mxu0 %v1080
    %v1370 = vpop.f32.mrf.mxu0
    %v1371 = vadd.f32 %v1258, %v1370
    %1372 = vmatmul.f32.gmra.mxu0 %v1082
    %v1373 = vpop.f32.mrf.mxu0
    %v1374 = vadd.f32 %v1261, %v1373
    %1375 = vmatmul.f32.gmra.mxu0 %v1084
    %v1376 = vpop.f32.mrf.mxu0
    %v1377 = vadd.f32 %v1264, %v1376
    %1378 = vmatmul.f32.gmra.mxu0 %v1086
    %v1379 = vpop.f32.mrf.mxu0
    %v1380 = vadd.f32 %v1267, %v1379
    %1381 = vmatmul.f32.gmra.mxu0 %v1088
    %v1382 = vpop.f32.mrf.mxu0
    %v1383 = vadd.f32 %v1270, %v1382
    %1384 = vdwg.mxu0
    %1385 = vmatpush.msra.mxu0 %v1120
    %1386 = vmatpush.msra.mxu0 %v1118
    %1387 = vmatpush.msra.mxu0 %v1116
    %1388 = vmatpush.msra.mxu0 %v1114
    %1389 = vmatpush.msra.mxu0 %v1112
    %1390 = vmatpush.msra.mxu0 %v1110
    %1391 = vmatpush.msra.mxu0 %v1108
    %1392 = vmatpush.msra.mxu0 %v1106
    %1393 = vmatpush.msra.mxu0 %v1104
    %1394 = vmatpush.msra.mxu0 %v1102
    %1395 = vmatpush.msra.mxu0 %v1100
    %1396 = vmatpush.msra.mxu0 %v1098
    %1397 = vmatpush.msra.mxu0 %v1096
    %1398 = vmatpush.msra.mxu0 %v1094
    %1399 = vmatpush.msra.mxu0 %v1092
    %1400 = vmatpush.msra.mxu0 %v1090
    %1401 = vmatmul.f32.gmra.mxu0 %v1025
    %v1402 = vpop.f32.mrf.mxu0
    %v1403 = vadd.f32 %v1156, %v1402
    %1404 = vmatmul.f32.gmra.mxu0 %v1027
    %v1405 = vpop.f32.mrf.mxu0
    %v1406 = vadd.f32 %v1156, %v1405
    %1407 = vmatmul.f32.gmra.mxu0 %v1029
    %v1408 = vpop.f32.mrf.mxu0
    %v1409 = vadd.f32 %v1156, %v1408
    %1410 = vmatmul.f32.gmra.mxu0 %v1031
    %v1411 = vpop.f32.mrf.mxu0
    %v1412 = vadd.f32 %v1156, %v1411
    %1413 = vmatmul.f32.gmra.mxu0 %v1033
    %v1414 = vpop.f32.mrf.mxu0
    %v1415 = vadd.f32 %v1156, %v1414
    %1416 = vmatmul.f32.gmra.mxu0 %v1035
    %v1417 = vpop.f32.mrf.mxu0
    %v1418 = vadd.f32 %v1156, %v1417
    %1419 = vmatmul.f32.gmra.mxu0 %v1037
    %v1420 = vpop.f32.mrf.mxu0
    %v1421 = vadd.f32 %v1156, %v1420
    %1422 = vmatmul.f32.gmra.mxu0 %v1039
    %v1423 = vpop.f32.mrf.mxu0
    %v1424 = vadd.f32 %v1156, %v1423
    %1425 = vmatmul.f32.gmra.mxu0 %v1041
    %v1426 = vpop.f32.mrf.mxu0
    %v1427 = vadd.f32 %v1156, %v1426
    %1428 = vmatmul.f32.gmra.mxu0 %v1043
    %v1429 = vpop.f32.mrf.mxu0
    %v1430 = vadd.f32 %v1156, %v1429
    %1431 = vmatmul.f32.gmra.mxu0 %v1045
    %v1432 = vpop.f32.mrf.mxu0
    %v1433 = vadd.f32 %v1156, %v1432
    %1434 = vmatmul.f32.gmra.mxu0 %v1047
    %v1435 = vpop.f32.mrf.mxu0
    %v1436 = vadd.f32 %v1156, %v1435
    %1437 = vmatmul.f32.gmra.mxu0 %v1049
    %v1438 = vpop.f32.mrf.mxu0
    %v1439 = vadd.f32 %v1156, %v1438
    %1440 = vmatmul.f32.gmra.mxu0 %v1051
    %v1441 = vpop.f32.mrf.mxu0
    %v1442 = vadd.f32 %v1156, %v1441
    %1443 = vmatmul.f32.gmra.mxu0 %v1053
    %v1444 = vpop.f32.mrf.mxu0
    %v1445 = vadd.f32 %v1156, %v1444
    %1446 = vmatmul.f32.gmra.mxu0 %v1055
    %v1447 = vpop.f32.mrf.mxu0
    %v1448 = vadd.f32 %v1156, %v1447
    %1449 = vmatmul.f32.gmra.mxu0 %v1057
    %v1450 = vpop.f32.mrf.mxu0
    %v1451 = vadd.f32 %v1156, %v1450
    %1452 = vmatmul.f32.gmra.mxu0 %v1059
    %v1453 = vpop.f32.mrf.mxu0
    %v1454 = vadd.f32 %v1156, %v1453
    %1455 = vmatmul.f32.gmra.mxu0 %v1061
    %v1456 = vpop.f32.mrf.mxu0
    %v1457 = vadd.f32 %v1156, %v1456
    %1458 = vmatmul.f32.gmra.mxu0 %v1063
    %v1459 = vpop.f32.mrf.mxu0
    %v1460 = vadd.f32 %v1156, %v1459
    %1461 = vmatmul.f32.gmra.mxu0 %v1065
    %v1462 = vpop.f32.mrf.mxu0
    %v1463 = vadd.f32 %v1156, %v1462
    %1464 = vmatmul.f32.gmra.mxu0 %v1067
    %v1465 = vpop.f32.mrf.mxu0
    %v1466 = vadd.f32 %v1156, %v1465
    %1467 = vmatmul.f32.gmra.mxu0 %v1069
    %v1468 = vpop.f32.mrf.mxu0
    %v1469 = vadd.f32 %v1156, %v1468
    %1470 = vmatmul.f32.gmra.mxu0 %v1071
    %v1471 = vpop.f32.mrf.mxu0
    %v1472 = vadd.f32 %v1156, %v1471
    %1473 = vmatmul.f32.gmra.mxu0 %v1073
    %v1474 = vpop.f32.mrf.mxu0
    %v1475 = vadd.f32 %v1156, %v1474
    %1476 = vmatmul.f32.gmra.mxu0 %v1075
    %v1477 = vpop.f32.mrf.mxu0
    %v1478 = vadd.f32 %v1156, %v1477
    %1479 = vmatmul.f32.gmra.mxu0 %v1077
    %v1480 = vpop.f32.mrf.mxu0
    %v1481 = vadd.f32 %v1156, %v1480
    %1482 = vmatmul.f32.gmra.mxu0 %v1079
    %v1483 = vpop.f32.mrf.mxu0
    %v1484 = vadd.f32 %v1156, %v1483
    %1485 = vmatmul.f32.gmra.mxu0 %v1081
    %v1486 = vpop.f32.mrf.mxu0
    %v1487 = vadd.f32 %v1156, %v1486
    %1488 = vmatmul.f32.gmra.mxu0 %v1083
    %v1489 = vpop.f32.mrf.mxu0
    %v1490 = vadd.f32 %v1156, %v1489
    %1491 = vmatmul.f32.gmra.mxu0 %v1085
    %v1492 = vpop.f32.mrf.mxu0
    %v1493 = vadd.f32 %v1156, %v1492
    %1494 = vmatmul.f32.gmra.mxu0 %v1087
    %v1495 = vpop.f32.mrf.mxu0
    %v1496 = vadd.f32 %v1156, %v1495
    %1497 = vdwg.mxu0
    %1498 = vmatpush.msra.mxu0 %v1152
    %1499 = vmatpush.msra.mxu0 %v1150
    %1500 = vmatpush.msra.mxu0 %v1148
    %1501 = vmatpush.msra.mxu0 %v1146
    %1502 = vmatpush.msra.mxu0 %v1144
    %1503 = vmatpush.msra.mxu0 %v1142
    %1504 = vmatpush.msra.mxu0 %v1140
    %1505 = vmatpush.msra.mxu0 %v1138
    %1506 = vmatpush.msra.mxu0 %v1136
    %1507 = vmatpush.msra.mxu0 %v1134
    %1508 = vmatpush.msra.mxu0 %v1132
    %1509 = vmatpush.msra.mxu0 %v1130
    %1510 = vmatpush.msra.mxu0 %v1128
    %1511 = vmatpush.msra.mxu0 %v1126
    %1512 = vmatpush.msra.mxu0 %v1124
    %1513 = vmatpush.msra.mxu0 %v1122
    %1514 = vmatmul.f32.gmra.mxu0 %v1026
    %v1515 = vpop.f32.mrf.mxu0
    %v1516 = vadd.f32 %v1403, %v1515
    %1517 = vmatmul.f32.gmra.mxu0 %v1028
    %v1518 = vpop.f32.mrf.mxu0
    %v1519 = vadd.f32 %v1406, %v1518
    %1520 = vmatmul.f32.gmra.mxu0 %v1030
    %v1521 = vpop.f32.mrf.mxu0
    %v1522 = vadd.f32 %v1409, %v1521
    %1523 = vmatmul.f32.gmra.mxu0 %v1032
    %v1524 = vpop.f32.mrf.mxu0
    %v1525 = vadd.f32 %v1412, %v1524
    %1526 = vmatmul.f32.gmra.mxu0 %v1034
    %v1527 = vpop.f32.mrf.mxu0
    %v1528 = vadd.f32 %v1415, %v1527
    %1529 = vmatmul.f32.gmra.mxu0 %v1036
    %v1530 = vpop.f32.mrf.mxu0
    %v1531 = vadd.f32 %v1418, %v1530
    %1532 = vmatmul.f32.gmra.mxu0 %v1038
    %v1533 = vpop.f32.mrf.mxu0
    %v1534 = vadd.f32 %v1421, %v1533
    %1535 = vmatmul.f32.gmra.mxu0 %v1040
    %v1536 = vpop.f32.mrf.mxu0
    %v1537 = vadd.f32 %v1424, %v1536
    %1538 = vmatmul.f32.gmra.mxu0 %v1042
    %v1539 = vpop.f32.mrf.mxu0
    %v1540 = vadd.f32 %v1427, %v1539
    %1541 = vmatmul.f32.gmra.mxu0 %v1044
    %v1542 = vpop.f32.mrf.mxu0
    %v1543 = vadd.f32 %v1430, %v1542
    %1544 = vmatmul.f32.gmra.mxu0 %v1046
    %v1545 = vpop.f32.mrf.mxu0
    %v1546 = vadd.f32 %v1433, %v1545
    %1547 = vmatmul.f32.gmra.mxu0 %v1048
    %v1548 = vpop.f32.mrf.mxu0
    %v1549 = vadd.f32 %v1436, %v1548
    %1550 = vmatmul.f32.gmra.mxu0 %v1050
    %v1551 = vpop.f32.mrf.mxu0
    %v1552 = vadd.f32 %v1439, %v1551
    %1553 = vmatmul.f32.gmra.mxu0 %v1052
    %v1554 = vpop.f32.mrf.mxu0
    %v1555 = vadd.f32 %v1442, %v1554
    %1556 = vmatmul.f32.gmra.mxu0 %v1054
    %v1557 = vpop.f32.mrf.mxu0
    %v1558 = vadd.f32 %v1445, %v1557
    %1559 = vmatmul.f32.gmra.mxu0 %v1056
    %v1560 = vpop.f32.mrf.mxu0
    %v1561 = vadd.f32 %v1448, %v1560
    %1562 = vmatmul.f32.gmra.mxu0 %v1058
    %v1563 = vpop.f32.mrf.mxu0
    %v1564 = vadd.f32 %v1451, %v1563
    %1565 = vmatmul.f32.gmra.mxu0 %v1060
    %v1566 = vpop.f32.mrf.mxu0
    %v1567 = vadd.f32 %v1454, %v1566
    %1568 = vmatmul.f32.gmra.mxu0 %v1062
    %v1569 = vpop.f32.mrf.mxu0
    %v1570 = vadd.f32 %v1457, %v1569
    %1571 = vmatmul.f32.gmra.mxu0 %v1064
    %v1572 = vpop.f32.mrf.mxu0
    %v1573 = vadd.f32 %v1460, %v1572
    %1574 = vmatmul.f32.gmra.mxu0 %v1066
    %v1575 = vpop.f32.mrf.mxu0
    %v1576 = vadd.f32 %v1463, %v1575
    %1577 = vmatmul.f32.gmra.mxu0 %v1068
    %v1578 = vpop.f32.mrf.mxu0
    %v1579 = vadd.f32 %v1466, %v1578
    %1580 = vmatmul.f32.gmra.mxu0 %v1070
    %v1581 = vpop.f32.mrf.mxu0
    %v1582 = vadd.f32 %v1469, %v1581
    %1583 = vmatmul.f32.gmra.mxu0 %v1072
    %v1584 = vpop.f32.mrf.mxu0
    %v1585 = vadd.f32 %v1472, %v1584
    %1586 = vmatmul.f32.gmra.mxu0 %v1074
    %v1587 = vpop.f32.mrf.mxu0
    %v1588 = vadd.f32 %v1475, %v1587
    %1589 = vmatmul.f32.gmra.mxu0 %v1076
    %v1590 = vpop.f32.mrf.mxu0
    %v1591 = vadd.f32 %v1478, %v1590
    %1592 = vmatmul.f32.gmra.mxu0 %v1078
    %v1593 = vpop.f32.mrf.mxu0
    %v1594 = vadd.f32 %v1481, %v1593
    %1595 = vmatmul.f32.gmra.mxu0 %v1080
    %v1596 = vpop.f32.mrf.mxu0
    %v1597 = vadd.f32 %v1484, %v1596
    %1598 = vmatmul.f32.gmra.mxu0 %v1082
    %v1599 = vpop.f32.mrf.mxu0
    %v1600 = vadd.f32 %v1487, %v1599
    %1601 = vmatmul.f32.gmra.mxu0 %v1084
    %v1602 = vpop.f32.mrf.mxu0
    %v1603 = vadd.f32 %v1490, %v1602
    %1604 = vmatmul.f32.gmra.mxu0 %v1086
    %v1605 = vpop.f32.mrf.mxu0
    %v1606 = vadd.f32 %v1493, %v1605
    %1607 = vmatmul.f32.gmra.mxu0 %v1088
    %v1608 = vpop.f32.mrf.mxu0
    %v1609 = vadd.f32 %v1496, %v1608
    %1610 = vdwg.mxu0
    %v1611 = vtanh.pop %v1290
    %v1612 = vtanh.pop %v1516
    %v1613 = vtanh.pop %v1293
    %v1614 = vtanh.pop %v1519
    %v1615 = vtanh.pop %v1296
    %v1616 = vtanh.pop %v1522
    %v1617 = vtanh.pop %v1299
    %v1618 = vtanh.pop %v1525
    %v1619 = vtanh.pop %v1302
    %v1620 = vtanh.pop %v1528
    %v1621 = vtanh.pop %v1305
    %v1622 = vtanh.pop %v1531
    %v1623 = vtanh.pop %v1308
    %v1624 = vtanh.pop %v1534
    %v1625 = vtanh.pop %v1311
    %v1626 = vtanh.pop %v1537
    %v1627 = vtanh.pop %v1314
    %v1628 = vtanh.pop %v1540
    %v1629 = vtanh.pop %v1317
    %v1630 = vtanh.pop %v1543
    %v1631 = vtanh.pop %v1320
    %v1632 = vtanh.pop %v1546
    %v1633 = vtanh.pop %v1323
    %v1634 = vtanh.pop %v1549
    %v1635 = vtanh.pop %v1326
    %v1636 = vtanh.pop %v1552
    %v1637 = vtanh.pop %v1329
    %v1638 = vtanh.pop %v1555
    %v1639 = vtanh.pop %v1332
    %v1640 = vtanh.pop %v1558
    %v1641 = vtanh.pop %v1335
    %v1642 = vtanh.pop %v1561
    %v1643 = vtanh.pop %v1338
    %v1644 = vtanh.pop %v1564
    %v1645 = vtanh.pop %v1341
    %v1646 = vtanh.pop %v1567
    %v1647 = vtanh.pop %v1344
    %v1648 = vtanh.pop %v1570
    %v1649 = vtanh.pop %v1347
    %v1650 = vtanh.pop %v1573
    %v1651 = vtanh.pop %v1350
    %v1652 = vtanh.pop %v1576
    %v1653 = vtanh.pop %v1353
    %v1654 = vtanh.pop %v1579
    %v1655 = vtanh.pop %v1356
    %v1656 = vtanh.pop %v1582
    %v1657 = vtanh.pop %v1359
    %v1658 = vtanh.pop %v1585
    %v1659 = vtanh.pop %v1362
    %v1660 = vtanh.pop %v1588
    %v1661 = vtanh.pop %v1365
    %v1662 = vtanh.pop %v1591
    %v1663 = vtanh.pop %v1368
    %v1664 = vtanh.pop %v1594
    %v1665 = vtanh.pop %v1371
    %v1666 = vtanh.pop %v1597
    %v1667 = vtanh.pop %v1374
    %v1668 = vtanh.pop %v1600
    %v1669 = vtanh.pop %v1377
    %v1670 = vtanh.pop %v1603
    %v1671 = vtanh.pop %v1380
    %v1672 = vtanh.pop %v1606
    %v1673 = vtanh.pop %v1383
    %v1674 = vtanh.pop %v1609
    %v1675 = vmul.f32 %v1611, %v1612
    %v1676 = vmul.f32 %v1613, %v1614
    %v1677 = vmul.f32 %v1615, %v1616
    %v1678 = vmul.f32 %v1617, %v1618
    %v1679 = vmul.f32 %v1619, %v1620
    %v1680 = vmul.f32 %v1621, %v1622
    %v1681 = vmul.f32 %v1623, %v1624
    %v1682 = vmul.f32 %v1625, %v1626
    %v1683 = vmul.f32 %v1627, %v1628
    %v1684 = vmul.f32 %v1629, %v1630
    %v1685 = vmul.f32 %v1631, %v1632
    %v1686 = vmul.f32 %v1633, %v1634
    %v1687 = vmul.f32 %v1635, %v1636
    %v1688 = vmul.f32 %v1637, %v1638
    %v1689 = vmul.f32 %v1639, %v1640
    %v1690 = vmul.f32 %v1641, %v1642
    %v1691 = vmul.f32 %v1643, %v1644
    %v1692 = vmul.f32 %v1645, %v1646
    %v1693 = vmul.f32 %v1647, %v1648
    %v1694 = vmul.f32 %v1649, %v1650
    %v1695 = vmul.f32 %v1651, %v1652
    %v1696 = vmul.f32 %v1653, %v1654
    %v1697 = vmul.f32 %v1655, %v1656
    %v1698 = vmul.f32 %v1657, %v1658
    %v1699 = vmul.f32 %v1659, %v1660
    %v1700 = vmul.f32 %v1661, %v1662
    %v1701 = vmul.f32 %v1663, %v1664
    %v1702 = vmul.f32 %v1665, %v1666
    %v1703 = vmul.f32 %v1667, %v1668
    %v1704 = vmul.f32 %v1669, %v1670
    %v1705 = vmul.f32 %v1671, %v1672
    %v1706 = vmul.f32 %v1673, %v1674
    %v1707 = vld [vmem:[%s7] sm:$0xff]
    %v1708 = vld [vmem:[%s7 + $0x8] sm:$0xff]
    %v1709 = vld [vmem:[%s7 + $0x10] sm:$0xff]
    %v1710 = vld [vmem:[%s7 + $0x18] sm:$0xff]
    %v1711 = vld [vmem:[%s7 + $0x20] sm:$0xff]
    %v1712 = vld [vmem:[%s7 + $0x28] sm:$0xff]
    %v1713 = vld [vmem:[%s7 + $0x30] sm:$0xff]
    %v1714 = vld [vmem:[%s7 + $0x38] sm:$0xff]
    %v1715 = vld [vmem:[%s7 + $0x40] sm:$0xff]
    %v1716 = vld [vmem:[%s7 + $0x48] sm:$0xff]
    %v1717 = vld [vmem:[%s7 + $0x50] sm:$0xff]
    %v1718 = vld [vmem:[%s7 + $0x58] sm:$0xff]
    %v1719 = vld [vmem:[%s7 + $0x60] sm:$0xff]
    %v1720 = vld [vmem:[%s7 + $0x68] sm:$0xff]
    %v1721 = vld [vmem:[%s7 + $0x70] sm:$0xff]
    %v1722 = vld [vmem:[%s7 + $0x78] sm:$0xff]
    %v1723 = vld [vmem:[%s8] sm:$0x1]
    %v1725 = vperm.slane %v1723, 0
    %1727 = vmatpush.msra.mxu0 %v1722
    %1728 = vmatpush.msra.mxu0 %v1721
    %1729 = vmatpush.msra.mxu0 %v1720
    %1730 = vmatpush.msra.mxu0 %v1719
    %1731 = vmatpush.msra.mxu0 %v1718
    %1732 = vmatpush.msra.mxu0 %v1717
    %1733 = vmatpush.msra.mxu0 %v1716
    %1734 = vmatpush.msra.mxu0 %v1715
    %1735 = vmatpush.msra.mxu0 %v1714
    %1736 = vmatpush.msra.mxu0 %v1713
    %1737 = vmatpush.msra.mxu0 %v1712
    %1738 = vmatpush.msra.mxu0 %v1711
    %1739 = vmatpush.msra.mxu0 %v1710
    %1740 = vmatpush.msra.mxu0 %v1709
    %1741 = vmatpush.msra.mxu0 %v1708
    %1742 = vmatpush.msra.mxu0 %v1707
    %1743 = vmatmul.f32.gmra.mxu0 %v1675
    %v1744 = vpop.f32.mrf.mxu0
    %v1745 = vadd.f32 %v1725, %v1744
    %1746 = vmatmul.f32.gmra.mxu0 %v1676
    %v1747 = vpop.f32.mrf.mxu0
    %v1748 = vadd.f32 %v1725, %v1747
    %1749 = vmatmul.f32.gmra.mxu0 %v1677
    %v1750 = vpop.f32.mrf.mxu0
    %v1751 = vadd.f32 %v1725, %v1750
    %1752 = vmatmul.f32.gmra.mxu0 %v1678
    %v1753 = vpop.f32.mrf.mxu0
    %v1754 = vadd.f32 %v1725, %v1753
    %1755 = vmatmul.f32.gmra.mxu0 %v1679
    %v1756 = vpop.f32.mrf.mxu0
    %v1757 = vadd.f32 %v1725, %v1756
    %1758 = vmatmul.f32.gmra.mxu0 %v1680
    %v1759 = vpop.f32.mrf.mxu0
    %v1760 = vadd.f32 %v1725, %v1759
    %1761 = vmatmul.f32.gmra.mxu0 %v1681
    %v1762 = vpop.f32.mrf.mxu0
    %v1763 = vadd.f32 %v1725, %v1762
    %1764 = vmatmul.f32.gmra.mxu0 %v1682
    %v1765 = vpop.f32.mrf.mxu0
    %v1766 = vadd.f32 %v1725, %v1765
    %1767 = vmatmul.f32.gmra.mxu0 %v1683
    %v1768 = vpop.f32.mrf.mxu0
    %v1769 = vadd.f32 %v1725, %v1768
    %1770 = vmatmul.f32.gmra.mxu0 %v1684
    %v1771 = vpop.f32.mrf.mxu0
    %v1772 = vadd.f32 %v1725, %v1771
    %1773 = vmatmul.f32.gmra.mxu0 %v1685
    %v1774 = vpop.f32.mrf.mxu0
    %v1775 = vadd.f32 %v1725, %v1774
    %1776 = vmatmul.f32.gmra.mxu0 %v1686
    %v1777 = vpop.f32.mrf.mxu0
    %v1778 = vadd.f32 %v1725, %v1777
    %1779 = vmatmul.f32.gmra.mxu0 %v1687
    %v1780 = vpop.f32.mrf.mxu0
    %v1781 = vadd.f32 %v1725, %v1780
    %1782 = vmatmul.f32.gmra.mxu0 %v1688
    %v1783 = vpop.f32.mrf.mxu0
    %v1784 = vadd.f32 %v1725, %v1783
    %1785 = vmatmul.f32.gmra.mxu0 %v1689
    %v1786 = vpop.f32.mrf.mxu0
    %v1787 = vadd.f32 %v1725, %v1786
    %1788 = vmatmul.f32.gmra.mxu0 %v1690
    %v1789 = vpop.f32.mrf.mxu0
    %v1790 = vadd.f32 %v1725, %v1789
    %1791 = vmatmul.f32.gmra.mxu0 %v1691
    %v1792 = vpop.f32.mrf.mxu0
    %v1793 = vadd.f32 %v1725, %v1792
    %1794 = vmatmul.f32.gmra.mxu0 %v1692
    %v1795 = vpop.f32.mrf.mxu0
    %v1796 = vadd.f32 %v1725, %v1795
    %1797 = vmatmul.f32.gmra.mxu0 %v1693
    %v1798 = vpop.f32.mrf.mxu0
    %v1799 = vadd.f32 %v1725, %v1798
    %1800 = vmatmul.f32.gmra.mxu0 %v1694
    %v1801 = vpop.f32.mrf.mxu0
    %v1802 = vadd.f32 %v1725, %v1801
    %1803 = vmatmul.f32.gmra.mxu0 %v1695
    %v1804 = vpop.f32.mrf.mxu0
    %v1805 = vadd.f32 %v1725, %v1804
    %1806 = vmatmul.f32.gmra.mxu0 %v1696
    %v1807 = vpop.f32.mrf.mxu0
    %v1808 = vadd.f32 %v1725, %v1807
    %1809 = vmatmul.f32.gmra.mxu0 %v1697
    %v1810 = vpop.f32.mrf.mxu0
    %v1811 = vadd.f32 %v1725, %v1810
    %1812 = vmatmul.f32.gmra.mxu0 %v1698
    %v1813 = vpop.f32.mrf.mxu0
    %v1814 = vadd.f32 %v1725, %v1813
    %1815 = vmatmul.f32.gmra.mxu0 %v1699
    %v1816 = vpop.f32.mrf.mxu0
    %v1817 = vadd.f32 %v1725, %v1816
    %1818 = vmatmul.f32.gmra.mxu0 %v1700
    %v1819 = vpop.f32.mrf.mxu0
    %v1820 = vadd.f32 %v1725, %v1819
    %1821 = vmatmul.f32.gmra.mxu0 %v1701
    %v1822 = vpop.f32.mrf.mxu0
    %v1823 = vadd.f32 %v1725, %v1822
    %1824 = vmatmul.f32.gmra.mxu0 %v1702
    %v1825 = vpop.f32.mrf.mxu0
    %v1826 = vadd.f32 %v1725, %v1825
    %1827 = vmatmul.f32.gmra.mxu0 %v1703
    %v1828 = vpop.f32.mrf.mxu0
    %v1829 = vadd.f32 %v1725, %v1828
    %1830 = vmatmul.f32.gmra.mxu0 %v1704
    %v1831 = vpop.f32.mrf.mxu0
    %v1832 = vadd.f32 %v1725, %v1831
    %1833 = vmatmul.f32.gmra.mxu0 %v1705
    %v1834 = vpop.f32.mrf.mxu0
    %v1835 = vadd.f32 %v1725, %v1834
    %1836 = vmatmul.f32.gmra.mxu0 %v1706
    %v1837 = vpop.f32.mrf.mxu0
    %v1838 = vadd.f32 %v1725, %v1837
    %1839 = vdwg.mxu0
    %1840 = vst [vmem:[#allocation7] sm:$0xff] %v1745
    %1841 = vst [vmem:[#allocation7 + $0x8] sm:$0xff] %v1748
    %1842 = vst [vmem:[#allocation7 + $0x10] sm:$0xff] %v1751
    %1843 = vst [vmem:[#allocation7 + $0x18] sm:$0xff] %v1754
    %1844 = vst [vmem:[#allocation7 + $0x20] sm:$0xff] %v1757
    %1845 = vst [vmem:[#allocation7 + $0x28] sm:$0xff] %v1760
    %1846 = vst [vmem:[#allocation7 + $0x30] sm:$0xff] %v1763
    %1847 = vst [vmem:[#allocation7 + $0x38] sm:$0xff] %v1766
    %1848 = vst [vmem:[#allocation7 + $0x40] sm:$0xff] %v1769
    %1849 = vst [vmem:[#allocation7 + $0x48] sm:$0xff] %v1772
    %1850 = vst [vmem:[#allocation7 + $0x50] sm:$0xff] %v1775
    %1851 = vst [vmem:[#allocation7 + $0x58] sm:$0xff] %v1778
    %1852 = vst [vmem:[#allocation7 + $0x60] sm:$0xff] %v1781
    %1853 = vst [vmem:[#allocation7 + $0x68] sm:$0xff] %v1784
    %1854 = vst [vmem:[#allocation7 + $0x70] sm:$0xff] %v1787
    %1855 = vst [vmem:[#allocation7 + $0x78] sm:$0xff] %v1790
    %1856 = vst [vmem:[#allocation7 + $0x80] sm:$0xff] %v1793
    %1857 = vst [vmem:[#allocation7 + $0x88] sm:$0xff] %v1796
    %1858 = vst [vmem:[#allocation7 + $0x90] sm:$0xff] %v1799
    %1859 = vst [vmem:[#allocation7 + $0x98] sm:$0xff] %v1802
    %1860 = vst [vmem:[#allocation7 + $0xa0] sm:$0xff] %v1805
    %1861 = vst [vmem:[#allocation7 + $0xa8] sm:$0xff] %v1808
    %1862 = vst [vmem:[#allocation7 + $0xb0] sm:$0xff] %v1811
    %1863 = vst [vmem:[#allocation7 + $0xb8] sm:$0xff] %v1814
    %1864 = vst [vmem:[#allocation7 + $0xc0] sm:$0xff] %v1817
    %1865 = vst [vmem:[#allocation7 + $0xc8] sm:$0xff] %v1820
    %1866 = vst [vmem:[#allocation7 + $0xd0] sm:$0xff] %v1823
    %1867 = vst [vmem:[#allocation7 + $0xd8] sm:$0xff] %v1826
    %1868 = vst [vmem:[#allocation7 + $0xe0] sm:$0xff] %v1829
    %1869 = vst [vmem:[#allocation7 + $0xe8] sm:$0xff] %v1832
    %1870 = vst [vmem:[#allocation7 + $0xf0] sm:$0xff] %v1835
    %1871 = vst [vmem:[#allocation7 + $0xf8] sm:$0xff] %v1838
    // Predicated region
    $region46: #{tpu_custom_call.1} parent=1 // pred_check
      _
    $region47: #{tpu_custom_call.1} parent=1 // pred_check_branch
      %1873 = sbr.rel (0) target = $region49
    $region48: #{tpu_custom_call.1} parent=1 // pred_region
      %1875 = vsyncadd [#allocation4], 0
      %s1876 = sshll.u32 [#allocation7], 4
      %s1877 = int_to_ptr.vmem [resolvable:$true] %s1876
      %s1878 = sshll.u32 %s9, 4
      %s1879 = int_to_ptr.hbm [resolvable:$true] %s1878
      %1884 = dma.vmem_to_hbm [thread:$0]  %s1877, 4096, %s1879, [#allocation4], 128, 128, 8
    $region49: #{tpu_custom_call.1} parent=1 // pred_fallthru
      _
    // Predicated region
    $region50: #{tpu_custom_call.1} parent=1 // pred_check
      _
    $region51: #{tpu_custom_call.1} parent=1 // pred_check_branch
      %1886 = sbr.rel (0) target = $region53
    $region52: #{tpu_custom_call.1} parent=1 // pred_region
      %1888 = dma.done [#allocation4], 4096
    $region53: #{tpu_custom_call.1} parent=1 // pred_fallthru
      _
    %1889 = vsyncpa [#allocation3], 1
    %1890 = vsyncpa [#allocation6], 1
    %1891 = vsyncpa [#allocation4], 1

</llo_original>
